<compile_context>
chip_gen: v6e
topology: v6e:2x2x1
jax: 0.10.0
libtpu: 0.0.40
codegen_flags: <defaults>
</compile_context>

<pallas_src>
import jax
import jax.numpy as jnp
from jax.experimental import pallas as pl
from jax.experimental.pallas import tpu as pltpu


def _lstm_policy_kernel(xg_ref,    # (T, Bp, 4H) f32 : x@W_ih0^T + b_ih0 + b_hh0, gates [i|f|o|g]
                        whh0_ref,  # (H, 4H)  bf16 : W_hh0^T
                        w1_ref,    # (2H, 4H) bf16 : [W_ih1^T ; W_hh1^T] stacked
                        b1_ref,    # (1, 4H)  f32 : b_ih1 + b_hh1
                        wfc_ref,   # (H, Dout) f32
                        bfc_ref,   # (1, Dout) f32
                        out_ref):  # (Bp, Dout) f32
    T, B, G = xg_ref.shape
    H = whh0_ref.shape[0]
    Dout = wfc_ref.shape[1]

    whh0 = whh0_ref[...]
    w1 = w1_ref[...]
    # Pre-broadcast biases ONCE (JAX does not CSE broadcast_in_dim inside loops).
    b1 = jnp.broadcast_to(b1_ref[...], (B, G))
    bfc = jnp.broadcast_to(bfc_ref[...], (B, Dout))

    def gates_to_hc(gates, c):
        # Gate order [i | f | o | g]: one sigmoid over 3H lanes + one tanh over H.
        sg = jax.nn.sigmoid(gates[:, :3 * H])
        i = sg[:, 0 * H:1 * H]
        f = sg[:, 1 * H:2 * H]
        o = sg[:, 2 * H:3 * H]
        g = jnp.tanh(gates[:, 3 * H:])
        c_new = f * c + i * g
        h_new = o * jnp.tanh(c_new)
        return h_new, c_new

    h1 = c1 = h2 = c2 = jnp.zeros((B, H), jnp.float32)

    # Fully static unroll of the time loop (T is small & static) — equivalent to
    # lax.fori_loop(..., unroll=True) but with static VMEM offsets for xg_ref[t].
    for t in range(T):
        # Layer 0: only the recurrent dot remains on the serial path (K=H).
        g0 = xg_ref[t] + jnp.dot(h1.astype(jnp.bfloat16), whh0,
                                 preferred_element_type=jnp.float32)
        h1, c1 = gates_to_hc(g0, c1)
        # Layer 1: fused single K=2H dot over [h1_t, h2_{t-1}].
        hcat = jnp.concatenate([h1, h2], axis=-1).astype(jnp.bfloat16)  # (B, 2H)
        g1 = jnp.dot(hcat, w1, preferred_element_type=jnp.float32) + b1
        h2, c2 = gates_to_hc(g1, c2)

    # fc on the last time step's top-layer hidden state, then softmax (all f32).
    logits = jnp.dot(h2, wfc_ref[...], preferred_element_type=jnp.float32) + bfc
    m = jnp.max(logits, axis=-1, keepdims=True)
    e = jnp.exp(logits - m)
    denom = jnp.sum(e, axis=-1, keepdims=True)
    out_ref[...] = (e * pl.reciprocal(denom, approx=False)).astype(out_ref.dtype)


def _reorder_gates(w):
    """PyTorch LSTM gate blocks along axis 0: [i|f|g|o] -> [i|f|o|g]."""
    i, f, g, o = jnp.split(w, 4, axis=0)
    return jnp.concatenate([i, f, o, g], axis=0)


@jax.jit
def policy_network_forward(x, params):
    """x: (B, T, input_dim) float32, batch_first like the PyTorch module."""
    B, T, Din = x.shape
    H = params["w_hh0"].shape[1]          # hidden_dim (== 128)
    Dout = params["w_fc"].shape[0]
    G = 4 * H
    f32 = jnp.float32
    bf16 = jnp.bfloat16

    # --- weight prep: gate reorder [i|f|o|g], transposes, bias folding, bf16 ---
    wih0 = _reorder_gates(params["w_ih0"]).astype(f32)                  # (4H, Din)
    b0 = _reorder_gates(params["b_ih0"] + params["b_hh0"]).astype(f32)  # (4H,)
    whh0 = _reorder_gates(params["w_hh0"]).T.astype(bf16)               # (H, 4H)
    w1 = jnp.concatenate([_reorder_gates(params["w_ih1"]).T,
                          _reorder_gates(params["w_hh1"]).T],
                         axis=0).astype(bf16)                           # (2H, 4H)
    b1 = _reorder_gates(params["b_ih1"] + params["b_hh1"]).reshape(1, G).astype(f32)
    wfc = params["w_fc"].T.astype(f32)                                  # (H, Dout)
    bfc = params["b_fc"].reshape(1, Dout).astype(f32)

    # --- hoisted, time-invariant layer-0 input projection (one big matmul) ---
    x_tm = jnp.transpose(x, (1, 0, 2)).astype(f32)                      # (T, B, Din)
    xg = jnp.einsum("tbd,gd->tbg", x_tm, wih0) + b0                     # (T, B, 4H)

    # Pad batch to a multiple of 8 (f32 sublane) for layout-friendly tiles.
    Bp = max(8, ((B + 7) // 8) * 8)
    if Bp != B:
        xg = jnp.pad(xg, ((0, 0), (0, Bp - B), (0, 0)))

    # TODO(synk): at large T*B, tile time with a grid axis ("arbitrary"), carry h/c in
    # VMEM scratch, and add a "parallel" batch axis (v7x megacore / 64 MiB VMEM);
    # whole-array-in-VMEM is fine at these toy shapes.
    vmem = pl.BlockSpec(memory_space=pltpu.MemorySpace.VMEM)
    out = pl.pallas_call(
        _lstm_policy_kernel,
        out_shape=jax.ShapeDtypeStruct((Bp, Dout), f32),
        in_specs=[vmem] * 6,
        out_specs=vmem,
    )(xg, whh0, w1, b1, wfc, bfc)
    return out[:B]


def init_params(key, input_dim, hidden_dim, output_dim):
    """Deterministic init with the same shapes as torch.nn.LSTM / nn.Linear."""
    ks = jax.random.split(key, 10)
    s = 1.0 / jnp.sqrt(hidden_dim)
    u = lambda k, shape: jax.random.uniform(k, shape, jnp.float32, -s, s)
    return {
        "w_ih0": u(ks[0], (4 * hidden_dim, input_dim)),
        "w_hh0": u(ks[1], (4 * hidden_dim, hidden_dim)),
        "b_ih0": u(ks[2], (4 * hidden_dim,)),
        "b_hh0": u(ks[3], (4 * hidden_dim,)),
        "w_ih1": u(ks[4], (4 * hidden_dim, hidden_dim)),
        "w_hh1": u(ks[5], (4 * hidden_dim, hidden_dim)),
        "b_ih1": u(ks[6], (4 * hidden_dim,)),
        "b_hh1": u(ks[7], (4 * hidden_dim,)),
        "w_fc": u(ks[8], (output_dim, hidden_dim)),
        "b_fc": u(ks[9], (output_dim,)),
    }


def policy_network_ref(x, params):
    """Pure-JAX f32 reference mirroring the PyTorch forward (for validation)."""
    B, T, _ = x.shape
    H = params["w_hh0"].shape[1]

    def cell(x_t, h, c, wih, whh, bih, bhh):
        gates = x_t @ wih.T + bih + h @ whh.T + bhh
        i, f, g, o = jnp.split(gates, 4, axis=-1)
        c_new = jax.nn.sigmoid(f) * c + jax.nn.sigmoid(i) * jnp.tanh(g)
        h_new = jax.nn.sigmoid(o) * jnp.tanh(c_new)
        return h_new, c_new

    h1 = c1 = h2 = c2 = jnp.zeros((B, H), jnp.float32)
    for t in range(T):
        h1, c1 = cell(x[:, t, :], h1, c1, params["w_ih0"], params["w_hh0"],
                      params["b_ih0"], params["b_hh0"])
        h2, c2 = cell(h1, h2, c2, params["w_ih1"], params["w_hh1"],
                      params["b_ih1"], params["b_hh1"])
    logits = h2 @ params["w_fc"].T + params["b_fc"]
    return jax.nn.softmax(logits, axis=-1)


if __name__ == "__main__":
    input_dim, hidden_dim, output_dim = 8, 128, 4   # hidden_dim must be 128 (see module)
    B, T = 2, 8

    key = jax.random.PRNGKey(0)
    kp, kx = jax.random.split(key)
    params = init_params(kp, input_dim, hidden_dim, output_dim)
    x = jax.random.normal(kx, (B, T, input_dim), jnp.float32)

    out = jax.block_until_ready(policy_network_forward(x, params))
    ref = policy_network_ref(x, params)

    assert out.shape == (B, output_dim)
    assert jnp.allclose(jnp.sum(out, axis=-1), 1.0, atol=1e-5)
    # Recurrent matmuls use bf16 MXU operands (f32 accumulation), so compare against
    # the pure-f32 reference with a correspondingly relaxed tolerance.
    assert jnp.allclose(out, ref, atol=1e-2, rtol=1e-2), (out, ref)
    print("KERNEL_OK")
</pallas_src>

<mosaic_0001>
module attributes {stable_mosaic.version = 11 : i64} {
  func.func @_lstm_policy_kernel(%arg0: memref<8x8x512xf32, #tpu.memory_space<vmem>>, %arg1: memref<128x512xbf16, #tpu.memory_space<vmem>>, %arg2: memref<256x512xbf16, #tpu.memory_space<vmem>>, %arg3: memref<1x512xf32, #tpu.memory_space<vmem>>, %arg4: memref<128x4xf32, #tpu.memory_space<vmem>>, %arg5: memref<1x4xf32, #tpu.memory_space<vmem>>, %arg6: memref<8x4xf32, #tpu.memory_space<vmem>>) attributes {dimension_semantics = [], scalar_prefetch = 0 : i64, scratch_operands = 0 : i64, tpu.core_type = #tpu.core_type<tc>} {
    %c0 = arith.constant 0 : index
    %c0_0 = arith.constant 0 : index
    %0 = vector.load %arg1[%c0, %c0_0] : memref<128x512xbf16, #tpu.memory_space<vmem>>, vector<128x512xbf16>
    %c0_1 = arith.constant 0 : index
    %c0_2 = arith.constant 0 : index
    %1 = vector.load %arg2[%c0_1, %c0_2] : memref<256x512xbf16, #tpu.memory_space<vmem>>, vector<256x512xbf16>
    %c0_3 = arith.constant 0 : index
    %c0_4 = arith.constant 0 : index
    %2 = vector.load %arg3[%c0_3, %c0_4] : memref<1x512xf32, #tpu.memory_space<vmem>>, vector<1x512xf32>
    %3 = vector.shape_cast %2 : vector<1x512xf32> to vector<1x512xf32>
    %4 = vector.broadcast %3 : vector<1x512xf32> to vector<8x512xf32>
    %c0_5 = arith.constant 0 : index
    %c0_6 = arith.constant 0 : index
    %5 = vector.load %arg5[%c0_5, %c0_6] : memref<1x4xf32, #tpu.memory_space<vmem>>, vector<1x4xf32>
    %6 = vector.shape_cast %5 : vector<1x4xf32> to vector<1x4xf32>
    %7 = vector.broadcast %6 : vector<1x4xf32> to vector<8x4xf32>
    %cst = arith.constant 0.000000e+00 : f32
    %8 = vector.broadcast %cst : f32 to vector<8x128xf32>
    %c0_7 = arith.constant 0 : index
    %c0_8 = arith.constant 0 : index
    %c0_9 = arith.constant 0 : index
    %9 = vector.load %arg0[%c0_7, %c0_8, %c0_9] : memref<8x8x512xf32, #tpu.memory_space<vmem>>, vector<1x8x512xf32>
    %10 = vector.shape_cast %9 : vector<1x8x512xf32> to vector<8x512xf32>
    %11 = arith.truncf %8 : vector<8x128xf32> to vector<8x128xbf16>
    %cst_10 = arith.constant dense<0.000000e+00> : vector<8x512xf32>
    %12 = tpu.matmul %11, %0, %cst_10 {dimension_numbers = #tpu.dot_dimension_numbers<[1], [0], [0], [1], [0, 0, 1, 1], [], []>} : vector<8x128xbf16>, vector<128x512xbf16>, vector<8x512xf32> -> vector<8x512xf32>
    %13 = arith.addf %10, %12 : vector<8x512xf32>
    %14 = vector.extract_strided_slice %13 {offsets = [0, 0], sizes = [8, 384], strides = [1, 1]} : vector<8x512xf32> to vector<8x384xf32>
    %15 = arith.negf %14 : vector<8x384xf32>
    %16 = math.exp %15 : vector<8x384xf32>
    %cst_11 = arith.constant 1.000000e+00 : f32
    %17 = vector.broadcast %cst_11 : f32 to vector<8x384xf32>
    %18 = arith.addf %17, %16 : vector<8x384xf32>
    %19 = arith.divf %17, %18 : vector<8x384xf32>
    %20 = vector.extract_strided_slice %19 {offsets = [0, 0], sizes = [8, 128], strides = [1, 1]} : vector<8x384xf32> to vector<8x128xf32>
    %21 = vector.extract_strided_slice %19 {offsets = [0, 128], sizes = [8, 128], strides = [1, 1]} : vector<8x384xf32> to vector<8x128xf32>
    %22 = vector.extract_strided_slice %19 {offsets = [0, 256], sizes = [8, 128], strides = [1, 1]} : vector<8x384xf32> to vector<8x128xf32>
    %23 = vector.extract_strided_slice %13 {offsets = [0, 384], sizes = [8, 128], strides = [1, 1]} : vector<8x512xf32> to vector<8x128xf32>
    %24 = math.tanh %23 : vector<8x128xf32>
    %25 = arith.mulf %21, %8 : vector<8x128xf32>
    %26 = arith.mulf %20, %24 : vector<8x128xf32>
    %27 = arith.addf %25, %26 : vector<8x128xf32>
    %28 = math.tanh %27 : vector<8x128xf32>
    %29 = arith.mulf %22, %28 : vector<8x128xf32>
    %30 = tpu.concatenate %29, %8 in 1 : vector<8x128xf32>, vector<8x128xf32> -> vector<8x256xf32>
    %31 = arith.truncf %30 : vector<8x256xf32> to vector<8x256xbf16>
    %cst_12 = arith.constant dense<0.000000e+00> : vector<8x512xf32>
    %32 = tpu.matmul %31, %1, %cst_12 {dimension_numbers = #tpu.dot_dimension_numbers<[1], [0], [0], [1], [0, 0, 1, 1], [], []>} : vector<8x256xbf16>, vector<256x512xbf16>, vector<8x512xf32> -> vector<8x512xf32>
    %33 = arith.addf %32, %4 : vector<8x512xf32>
    %34 = vector.extract_strided_slice %33 {offsets = [0, 0], sizes = [8, 384], strides = [1, 1]} : vector<8x512xf32> to vector<8x384xf32>
    %35 = arith.negf %34 : vector<8x384xf32>
    %36 = math.exp %35 : vector<8x384xf32>
    %cst_13 = arith.constant 1.000000e+00 : f32
    %37 = vector.broadcast %cst_13 : f32 to vector<8x384xf32>
    %38 = arith.addf %37, %36 : vector<8x384xf32>
    %39 = arith.divf %37, %38 : vector<8x384xf32>
    %40 = vector.extract_strided_slice %39 {offsets = [0, 0], sizes = [8, 128], strides = [1, 1]} : vector<8x384xf32> to vector<8x128xf32>
    %41 = vector.extract_strided_slice %39 {offsets = [0, 128], sizes = [8, 128], strides = [1, 1]} : vector<8x384xf32> to vector<8x128xf32>
    %42 = vector.extract_strided_slice %39 {offsets = [0, 256], sizes = [8, 128], strides = [1, 1]} : vector<8x384xf32> to vector<8x128xf32>
    %43 = vector.extract_strided_slice %33 {offsets = [0, 384], sizes = [8, 128], strides = [1, 1]} : vector<8x512xf32> to vector<8x128xf32>
    %44 = math.tanh %43 : vector<8x128xf32>
    %45 = arith.mulf %41, %8 : vector<8x128xf32>
    %46 = arith.mulf %40, %44 : vector<8x128xf32>
    %47 = arith.addf %45, %46 : vector<8x128xf32>
    %48 = math.tanh %47 : vector<8x128xf32>
    %49 = arith.mulf %42, %48 : vector<8x128xf32>
    %c1 = arith.constant 1 : index
    %c0_14 = arith.constant 0 : index
    %c0_15 = arith.constant 0 : index
    %50 = vector.load %arg0[%c1, %c0_14, %c0_15] : memref<8x8x512xf32, #tpu.memory_space<vmem>>, vector<1x8x512xf32>
    %51 = vector.shape_cast %50 : vector<1x8x512xf32> to vector<8x512xf32>
    %52 = arith.truncf %29 : vector<8x128xf32> to vector<8x128xbf16>
    %cst_16 = arith.constant dense<0.000000e+00> : vector<8x512xf32>
    %53 = tpu.matmul %52, %0, %cst_16 {dimension_numbers = #tpu.dot_dimension_numbers<[1], [0], [0], [1], [0, 0, 1, 1], [], []>} : vector<8x128xbf16>, vector<128x512xbf16>, vector<8x512xf32> -> vector<8x512xf32>
    %54 = arith.addf %51, %53 : vector<8x512xf32>
    %55 = vector.extract_strided_slice %54 {offsets = [0, 0], sizes = [8, 384], strides = [1, 1]} : vector<8x512xf32> to vector<8x384xf32>
    %56 = arith.negf %55 : vector<8x384xf32>
    %57 = math.exp %56 : vector<8x384xf32>
    %cst_17 = arith.constant 1.000000e+00 : f32
    %58 = vector.broadcast %cst_17 : f32 to vector<8x384xf32>
    %59 = arith.addf %58, %57 : vector<8x384xf32>
    %60 = arith.divf %58, %59 : vector<8x384xf32>
    %61 = vector.extract_strided_slice %60 {offsets = [0, 0], sizes = [8, 128], strides = [1, 1]} : vector<8x384xf32> to vector<8x128xf32>
    %62 = vector.extract_strided_slice %60 {offsets = [0, 128], sizes = [8, 128], strides = [1, 1]} : vector<8x384xf32> to vector<8x128xf32>
    %63 = vector.extract_strided_slice %60 {offsets = [0, 256], sizes = [8, 128], strides = [1, 1]} : vector<8x384xf32> to vector<8x128xf32>
    %64 = vector.extract_strided_slice %54 {offsets = [0, 384], sizes = [8, 128], strides = [1, 1]} : vector<8x512xf32> to vector<8x128xf32>
    %65 = math.tanh %64 : vector<8x128xf32>
    %66 = arith.mulf %62, %27 : vector<8x128xf32>
    %67 = arith.mulf %61, %65 : vector<8x128xf32>
    %68 = arith.addf %66, %67 : vector<8x128xf32>
    %69 = math.tanh %68 : vector<8x128xf32>
    %70 = arith.mulf %63, %69 : vector<8x128xf32>
    %71 = tpu.concatenate %70, %49 in 1 : vector<8x128xf32>, vector<8x128xf32> -> vector<8x256xf32>
    %72 = arith.truncf %71 : vector<8x256xf32> to vector<8x256xbf16>
    %cst_18 = arith.constant dense<0.000000e+00> : vector<8x512xf32>
    %73 = tpu.matmul %72, %1, %cst_18 {dimension_numbers = #tpu.dot_dimension_numbers<[1], [0], [0], [1], [0, 0, 1, 1], [], []>} : vector<8x256xbf16>, vector<256x512xbf16>, vector<8x512xf32> -> vector<8x512xf32>
    %74 = arith.addf %73, %4 : vector<8x512xf32>
    %75 = vector.extract_strided_slice %74 {offsets = [0, 0], sizes = [8, 384], strides = [1, 1]} : vector<8x512xf32> to vector<8x384xf32>
    %76 = arith.negf %75 : vector<8x384xf32>
    %77 = math.exp %76 : vector<8x384xf32>
    %cst_19 = arith.constant 1.000000e+00 : f32
    %78 = vector.broadcast %cst_19 : f32 to vector<8x384xf32>
    %79 = arith.addf %78, %77 : vector<8x384xf32>
    %80 = arith.divf %78, %79 : vector<8x384xf32>
    %81 = vector.extract_strided_slice %80 {offsets = [0, 0], sizes = [8, 128], strides = [1, 1]} : vector<8x384xf32> to vector<8x128xf32>
    %82 = vector.extract_strided_slice %80 {offsets = [0, 128], sizes = [8, 128], strides = [1, 1]} : vector<8x384xf32> to vector<8x128xf32>
    %83 = vector.extract_strided_slice %80 {offsets = [0, 256], sizes = [8, 128], strides = [1, 1]} : vector<8x384xf32> to vector<8x128xf32>
    %84 = vector.extract_strided_slice %74 {offsets = [0, 384], sizes = [8, 128], strides = [1, 1]} : vector<8x512xf32> to vector<8x128xf32>
    %85 = math.tanh %84 : vector<8x128xf32>
    %86 = arith.mulf %82, %47 : vector<8x128xf32>
    %87 = arith.mulf %81, %85 : vector<8x128xf32>
    %88 = arith.addf %86, %87 : vector<8x128xf32>
    %89 = math.tanh %88 : vector<8x128xf32>
    %90 = arith.mulf %83, %89 : vector<8x128xf32>
    %c2 = arith.constant 2 : index
    %c0_20 = arith.constant 0 : index
    %c0_21 = arith.constant 0 : index
    %91 = vector.load %arg0[%c2, %c0_20, %c0_21] : memref<8x8x512xf32, #tpu.memory_space<vmem>>, vector<1x8x512xf32>
    %92 = vector.shape_cast %91 : vector<1x8x512xf32> to vector<8x512xf32>
    %93 = arith.truncf %70 : vector<8x128xf32> to vector<8x128xbf16>
    %cst_22 = arith.constant dense<0.000000e+00> : vector<8x512xf32>
    %94 = tpu.matmul %93, %0, %cst_22 {dimension_numbers = #tpu.dot_dimension_numbers<[1], [0], [0], [1], [0, 0, 1, 1], [], []>} : vector<8x128xbf16>, vector<128x512xbf16>, vector<8x512xf32> -> vector<8x512xf32>
    %95 = arith.addf %92, %94 : vector<8x512xf32>
    %96 = vector.extract_strided_slice %95 {offsets = [0, 0], sizes = [8, 384], strides = [1, 1]} : vector<8x512xf32> to vector<8x384xf32>
    %97 = arith.negf %96 : vector<8x384xf32>
    %98 = math.exp %97 : vector<8x384xf32>
    %cst_23 = arith.constant 1.000000e+00 : f32
    %99 = vector.broadcast %cst_23 : f32 to vector<8x384xf32>
    %100 = arith.addf %99, %98 : vector<8x384xf32>
    %101 = arith.divf %99, %100 : vector<8x384xf32>
    %102 = vector.extract_strided_slice %101 {offsets = [0, 0], sizes = [8, 128], strides = [1, 1]} : vector<8x384xf32> to vector<8x128xf32>
    %103 = vector.extract_strided_slice %101 {offsets = [0, 128], sizes = [8, 128], strides = [1, 1]} : vector<8x384xf32> to vector<8x128xf32>
    %104 = vector.extract_strided_slice %101 {offsets = [0, 256], sizes = [8, 128], strides = [1, 1]} : vector<8x384xf32> to vector<8x128xf32>
    %105 = vector.extract_strided_slice %95 {offsets = [0, 384], sizes = [8, 128], strides = [1, 1]} : vector<8x512xf32> to vector<8x128xf32>
    %106 = math.tanh %105 : vector<8x128xf32>
    %107 = arith.mulf %103, %68 : vector<8x128xf32>
    %108 = arith.mulf %102, %106 : vector<8x128xf32>
    %109 = arith.addf %107, %108 : vector<8x128xf32>
    %110 = math.tanh %109 : vector<8x128xf32>
    %111 = arith.mulf %104, %110 : vector<8x128xf32>
    %112 = tpu.concatenate %111, %90 in 1 : vector<8x128xf32>, vector<8x128xf32> -> vector<8x256xf32>
    %113 = arith.truncf %112 : vector<8x256xf32> to vector<8x256xbf16>
    %cst_24 = arith.constant dense<0.000000e+00> : vector<8x512xf32>
    %114 = tpu.matmul %113, %1, %cst_24 {dimension_numbers = #tpu.dot_dimension_numbers<[1], [0], [0], [1], [0, 0, 1, 1], [], []>} : vector<8x256xbf16>, vector<256x512xbf16>, vector<8x512xf32> -> vector<8x512xf32>
    %115 = arith.addf %114, %4 : vector<8x512xf32>
    %116 = vector.extract_strided_slice %115 {offsets = [0, 0], sizes = [8, 384], strides = [1, 1]} : vector<8x512xf32> to vector<8x384xf32>
    %117 = arith.negf %116 : vector<8x384xf32>
    %118 = math.exp %117 : vector<8x384xf32>
    %cst_25 = arith.constant 1.000000e+00 : f32
    %119 = vector.broadcast %cst_25 : f32 to vector<8x384xf32>
    %120 = arith.addf %119, %118 : vector<8x384xf32>
    %121 = arith.divf %119, %120 : vector<8x384xf32>
    %122 = vector.extract_strided_slice %121 {offsets = [0, 0], sizes = [8, 128], strides = [1, 1]} : vector<8x384xf32> to vector<8x128xf32>
    %123 = vector.extract_strided_slice %121 {offsets = [0, 128], sizes = [8, 128], strides = [1, 1]} : vector<8x384xf32> to vector<8x128xf32>
    %124 = vector.extract_strided_slice %121 {offsets = [0, 256], sizes = [8, 128], strides = [1, 1]} : vector<8x384xf32> to vector<8x128xf32>
    %125 = vector.extract_strided_slice %115 {offsets = [0, 384], sizes = [8, 128], strides = [1, 1]} : vector<8x512xf32> to vector<8x128xf32>
    %126 = math.tanh %125 : vector<8x128xf32>
    %127 = arith.mulf %123, %88 : vector<8x128xf32>
    %128 = arith.mulf %122, %126 : vector<8x128xf32>
    %129 = arith.addf %127, %128 : vector<8x128xf32>
    %130 = math.tanh %129 : vector<8x128xf32>
    %131 = arith.mulf %124, %130 : vector<8x128xf32>
    %c3 = arith.constant 3 : index
    %c0_26 = arith.constant 0 : index
    %c0_27 = arith.constant 0 : index
    %132 = vector.load %arg0[%c3, %c0_26, %c0_27] : memref<8x8x512xf32, #tpu.memory_space<vmem>>, vector<1x8x512xf32>
    %133 = vector.shape_cast %132 : vector<1x8x512xf32> to vector<8x512xf32>
    %134 = arith.truncf %111 : vector<8x128xf32> to vector<8x128xbf16>
    %cst_28 = arith.constant dense<0.000000e+00> : vector<8x512xf32>
    %135 = tpu.matmul %134, %0, %cst_28 {dimension_numbers = #tpu.dot_dimension_numbers<[1], [0], [0], [1], [0, 0, 1, 1], [], []>} : vector<8x128xbf16>, vector<128x512xbf16>, vector<8x512xf32> -> vector<8x512xf32>
    %136 = arith.addf %133, %135 : vector<8x512xf32>
    %137 = vector.extract_strided_slice %136 {offsets = [0, 0], sizes = [8, 384], strides = [1, 1]} : vector<8x512xf32> to vector<8x384xf32>
    %138 = arith.negf %137 : vector<8x384xf32>
    %139 = math.exp %138 : vector<8x384xf32>
    %cst_29 = arith.constant 1.000000e+00 : f32
    %140 = vector.broadcast %cst_29 : f32 to vector<8x384xf32>
    %141 = arith.addf %140, %139 : vector<8x384xf32>
    %142 = arith.divf %140, %141 : vector<8x384xf32>
    %143 = vector.extract_strided_slice %142 {offsets = [0, 0], sizes = [8, 128], strides = [1, 1]} : vector<8x384xf32> to vector<8x128xf32>
    %144 = vector.extract_strided_slice %142 {offsets = [0, 128], sizes = [8, 128], strides = [1, 1]} : vector<8x384xf32> to vector<8x128xf32>
    %145 = vector.extract_strided_slice %142 {offsets = [0, 256], sizes = [8, 128], strides = [1, 1]} : vector<8x384xf32> to vector<8x128xf32>
    %146 = vector.extract_strided_slice %136 {offsets = [0, 384], sizes = [8, 128], strides = [1, 1]} : vector<8x512xf32> to vector<8x128xf32>
    %147 = math.tanh %146 : vector<8x128xf32>
    %148 = arith.mulf %144, %109 : vector<8x128xf32>
    %149 = arith.mulf %143, %147 : vector<8x128xf32>
    %150 = arith.addf %148, %149 : vector<8x128xf32>
    %151 = math.tanh %150 : vector<8x128xf32>
    %152 = arith.mulf %145, %151 : vector<8x128xf32>
    %153 = tpu.concatenate %152, %131 in 1 : vector<8x128xf32>, vector<8x128xf32> -> vector<8x256xf32>
    %154 = arith.truncf %153 : vector<8x256xf32> to vector<8x256xbf16>
    %cst_30 = arith.constant dense<0.000000e+00> : vector<8x512xf32>
    %155 = tpu.matmul %154, %1, %cst_30 {dimension_numbers = #tpu.dot_dimension_numbers<[1], [0], [0], [1], [0, 0, 1, 1], [], []>} : vector<8x256xbf16>, vector<256x512xbf16>, vector<8x512xf32> -> vector<8x512xf32>
    %156 = arith.addf %155, %4 : vector<8x512xf32>
    %157 = vector.extract_strided_slice %156 {offsets = [0, 0], sizes = [8, 384], strides = [1, 1]} : vector<8x512xf32> to vector<8x384xf32>
    %158 = arith.negf %157 : vector<8x384xf32>
    %159 = math.exp %158 : vector<8x384xf32>
    %cst_31 = arith.constant 1.000000e+00 : f32
    %160 = vector.broadcast %cst_31 : f32 to vector<8x384xf32>
    %161 = arith.addf %160, %159 : vector<8x384xf32>
    %162 = arith.divf %160, %161 : vector<8x384xf32>
    %163 = vector.extract_strided_slice %162 {offsets = [0, 0], sizes = [8, 128], strides = [1, 1]} : vector<8x384xf32> to vector<8x128xf32>
    %164 = vector.extract_strided_slice %162 {offsets = [0, 128], sizes = [8, 128], strides = [1, 1]} : vector<8x384xf32> to vector<8x128xf32>
    %165 = vector.extract_strided_slice %162 {offsets = [0, 256], sizes = [8, 128], strides = [1, 1]} : vector<8x384xf32> to vector<8x128xf32>
    %166 = vector.extract_strided_slice %156 {offsets = [0, 384], sizes = [8, 128], strides = [1, 1]} : vector<8x512xf32> to vector<8x128xf32>
    %167 = math.tanh %166 : vector<8x128xf32>
    %168 = arith.mulf %164, %129 : vector<8x128xf32>
    %169 = arith.mulf %163, %167 : vector<8x128xf32>
    %170 = arith.addf %168, %169 : vector<8x128xf32>
    %171 = math.tanh %170 : vector<8x128xf32>
    %172 = arith.mulf %165, %171 : vector<8x128xf32>
    %c4 = arith.constant 4 : index
    %c0_32 = arith.constant 0 : index
    %c0_33 = arith.constant 0 : index
    %173 = vector.load %arg0[%c4, %c0_32, %c0_33] : memref<8x8x512xf32, #tpu.memory_space<vmem>>, vector<1x8x512xf32>
    %174 = vector.shape_cast %173 : vector<1x8x512xf32> to vector<8x512xf32>
    %175 = arith.truncf %152 : vector<8x128xf32> to vector<8x128xbf16>
    %cst_34 = arith.constant dense<0.000000e+00> : vector<8x512xf32>
    %176 = tpu.matmul %175, %0, %cst_34 {dimension_numbers = #tpu.dot_dimension_numbers<[1], [0], [0], [1], [0, 0, 1, 1], [], []>} : vector<8x128xbf16>, vector<128x512xbf16>, vector<8x512xf32> -> vector<8x512xf32>
    %177 = arith.addf %174, %176 : vector<8x512xf32>
    %178 = vector.extract_strided_slice %177 {offsets = [0, 0], sizes = [8, 384], strides = [1, 1]} : vector<8x512xf32> to vector<8x384xf32>
    %179 = arith.negf %178 : vector<8x384xf32>
    %180 = math.exp %179 : vector<8x384xf32>
    %cst_35 = arith.constant 1.000000e+00 : f32
    %181 = vector.broadcast %cst_35 : f32 to vector<8x384xf32>
    %182 = arith.addf %181, %180 : vector<8x384xf32>
    %183 = arith.divf %181, %182 : vector<8x384xf32>
    %184 = vector.extract_strided_slice %183 {offsets = [0, 0], sizes = [8, 128], strides = [1, 1]} : vector<8x384xf32> to vector<8x128xf32>
    %185 = vector.extract_strided_slice %183 {offsets = [0, 128], sizes = [8, 128], strides = [1, 1]} : vector<8x384xf32> to vector<8x128xf32>
    %186 = vector.extract_strided_slice %183 {offsets = [0, 256], sizes = [8, 128], strides = [1, 1]} : vector<8x384xf32> to vector<8x128xf32>
    %187 = vector.extract_strided_slice %177 {offsets = [0, 384], sizes = [8, 128], strides = [1, 1]} : vector<8x512xf32> to vector<8x128xf32>
    %188 = math.tanh %187 : vector<8x128xf32>
    %189 = arith.mulf %185, %150 : vector<8x128xf32>
    %190 = arith.mulf %184, %188 : vector<8x128xf32>
    %191 = arith.addf %189, %190 : vector<8x128xf32>
    %192 = math.tanh %191 : vector<8x128xf32>
    %193 = arith.mulf %186, %192 : vector<8x128xf32>
    %194 = tpu.concatenate %193, %172 in 1 : vector<8x128xf32>, vector<8x128xf32> -> vector<8x256xf32>
    %195 = arith.truncf %194 : vector<8x256xf32> to vector<8x256xbf16>
    %cst_36 = arith.constant dense<0.000000e+00> : vector<8x512xf32>
    %196 = tpu.matmul %195, %1, %cst_36 {dimension_numbers = #tpu.dot_dimension_numbers<[1], [0], [0], [1], [0, 0, 1, 1], [], []>} : vector<8x256xbf16>, vector<256x512xbf16>, vector<8x512xf32> -> vector<8x512xf32>
    %197 = arith.addf %196, %4 : vector<8x512xf32>
    %198 = vector.extract_strided_slice %197 {offsets = [0, 0], sizes = [8, 384], strides = [1, 1]} : vector<8x512xf32> to vector<8x384xf32>
    %199 = arith.negf %198 : vector<8x384xf32>
    %200 = math.exp %199 : vector<8x384xf32>
    %cst_37 = arith.constant 1.000000e+00 : f32
    %201 = vector.broadcast %cst_37 : f32 to vector<8x384xf32>
    %202 = arith.addf %201, %200 : vector<8x384xf32>
    %203 = arith.divf %201, %202 : vector<8x384xf32>
    %204 = vector.extract_strided_slice %203 {offsets = [0, 0], sizes = [8, 128], strides = [1, 1]} : vector<8x384xf32> to vector<8x128xf32>
    %205 = vector.extract_strided_slice %203 {offsets = [0, 128], sizes = [8, 128], strides = [1, 1]} : vector<8x384xf32> to vector<8x128xf32>
    %206 = vector.extract_strided_slice %203 {offsets = [0, 256], sizes = [8, 128], strides = [1, 1]} : vector<8x384xf32> to vector<8x128xf32>
    %207 = vector.extract_strided_slice %197 {offsets = [0, 384], sizes = [8, 128], strides = [1, 1]} : vector<8x512xf32> to vector<8x128xf32>
    %208 = math.tanh %207 : vector<8x128xf32>
    %209 = arith.mulf %205, %170 : vector<8x128xf32>
    %210 = arith.mulf %204, %208 : vector<8x128xf32>
    %211 = arith.addf %209, %210 : vector<8x128xf32>
    %212 = math.tanh %211 : vector<8x128xf32>
    %213 = arith.mulf %206, %212 : vector<8x128xf32>
    %c5 = arith.constant 5 : index
    %c0_38 = arith.constant 0 : index
    %c0_39 = arith.constant 0 : index
    %214 = vector.load %arg0[%c5, %c0_38, %c0_39] : memref<8x8x512xf32, #tpu.memory_space<vmem>>, vector<1x8x512xf32>
    %215 = vector.shape_cast %214 : vector<1x8x512xf32> to vector<8x512xf32>
    %216 = arith.truncf %193 : vector<8x128xf32> to vector<8x128xbf16>
    %cst_40 = arith.constant dense<0.000000e+00> : vector<8x512xf32>
    %217 = tpu.matmul %216, %0, %cst_40 {dimension_numbers = #tpu.dot_dimension_numbers<[1], [0], [0], [1], [0, 0, 1, 1], [], []>} : vector<8x128xbf16>, vector<128x512xbf16>, vector<8x512xf32> -> vector<8x512xf32>
    %218 = arith.addf %215, %217 : vector<8x512xf32>
    %219 = vector.extract_strided_slice %218 {offsets = [0, 0], sizes = [8, 384], strides = [1, 1]} : vector<8x512xf32> to vector<8x384xf32>
    %220 = arith.negf %219 : vector<8x384xf32>
    %221 = math.exp %220 : vector<8x384xf32>
    %cst_41 = arith.constant 1.000000e+00 : f32
    %222 = vector.broadcast %cst_41 : f32 to vector<8x384xf32>
    %223 = arith.addf %222, %221 : vector<8x384xf32>
    %224 = arith.divf %222, %223 : vector<8x384xf32>
    %225 = vector.extract_strided_slice %224 {offsets = [0, 0], sizes = [8, 128], strides = [1, 1]} : vector<8x384xf32> to vector<8x128xf32>
    %226 = vector.extract_strided_slice %224 {offsets = [0, 128], sizes = [8, 128], strides = [1, 1]} : vector<8x384xf32> to vector<8x128xf32>
    %227 = vector.extract_strided_slice %224 {offsets = [0, 256], sizes = [8, 128], strides = [1, 1]} : vector<8x384xf32> to vector<8x128xf32>
    %228 = vector.extract_strided_slice %218 {offsets = [0, 384], sizes = [8, 128], strides = [1, 1]} : vector<8x512xf32> to vector<8x128xf32>
    %229 = math.tanh %228 : vector<8x128xf32>
    %230 = arith.mulf %226, %191 : vector<8x128xf32>
    %231 = arith.mulf %225, %229 : vector<8x128xf32>
    %232 = arith.addf %230, %231 : vector<8x128xf32>
    %233 = math.tanh %232 : vector<8x128xf32>
    %234 = arith.mulf %227, %233 : vector<8x128xf32>
    %235 = tpu.concatenate %234, %213 in 1 : vector<8x128xf32>, vector<8x128xf32> -> vector<8x256xf32>
    %236 = arith.truncf %235 : vector<8x256xf32> to vector<8x256xbf16>
    %cst_42 = arith.constant dense<0.000000e+00> : vector<8x512xf32>
    %237 = tpu.matmul %236, %1, %cst_42 {dimension_numbers = #tpu.dot_dimension_numbers<[1], [0], [0], [1], [0, 0, 1, 1], [], []>} : vector<8x256xbf16>, vector<256x512xbf16>, vector<8x512xf32> -> vector<8x512xf32>
    %238 = arith.addf %237, %4 : vector<8x512xf32>
    %239 = vector.extract_strided_slice %238 {offsets = [0, 0], sizes = [8, 384], strides = [1, 1]} : vector<8x512xf32> to vector<8x384xf32>
    %240 = arith.negf %239 : vector<8x384xf32>
    %241 = math.exp %240 : vector<8x384xf32>
    %cst_43 = arith.constant 1.000000e+00 : f32
    %242 = vector.broadcast %cst_43 : f32 to vector<8x384xf32>
    %243 = arith.addf %242, %241 : vector<8x384xf32>
    %244 = arith.divf %242, %243 : vector<8x384xf32>
    %245 = vector.extract_strided_slice %244 {offsets = [0, 0], sizes = [8, 128], strides = [1, 1]} : vector<8x384xf32> to vector<8x128xf32>
    %246 = vector.extract_strided_slice %244 {offsets = [0, 128], sizes = [8, 128], strides = [1, 1]} : vector<8x384xf32> to vector<8x128xf32>
    %247 = vector.extract_strided_slice %244 {offsets = [0, 256], sizes = [8, 128], strides = [1, 1]} : vector<8x384xf32> to vector<8x128xf32>
    %248 = vector.extract_strided_slice %238 {offsets = [0, 384], sizes = [8, 128], strides = [1, 1]} : vector<8x512xf32> to vector<8x128xf32>
    %249 = math.tanh %248 : vector<8x128xf32>
    %250 = arith.mulf %246, %211 : vector<8x128xf32>
    %251 = arith.mulf %245, %249 : vector<8x128xf32>
    %252 = arith.addf %250, %251 : vector<8x128xf32>
    %253 = math.tanh %252 : vector<8x128xf32>
    %254 = arith.mulf %247, %253 : vector<8x128xf32>
    %c6 = arith.constant 6 : index
    %c0_44 = arith.constant 0 : index
    %c0_45 = arith.constant 0 : index
    %255 = vector.load %arg0[%c6, %c0_44, %c0_45] : memref<8x8x512xf32, #tpu.memory_space<vmem>>, vector<1x8x512xf32>
    %256 = vector.shape_cast %255 : vector<1x8x512xf32> to vector<8x512xf32>
    %257 = arith.truncf %234 : vector<8x128xf32> to vector<8x128xbf16>
    %cst_46 = arith.constant dense<0.000000e+00> : vector<8x512xf32>
    %258 = tpu.matmul %257, %0, %cst_46 {dimension_numbers = #tpu.dot_dimension_numbers<[1], [0], [0], [1], [0, 0, 1, 1], [], []>} : vector<8x128xbf16>, vector<128x512xbf16>, vector<8x512xf32> -> vector<8x512xf32>
    %259 = arith.addf %256, %258 : vector<8x512xf32>
    %260 = vector.extract_strided_slice %259 {offsets = [0, 0], sizes = [8, 384], strides = [1, 1]} : vector<8x512xf32> to vector<8x384xf32>
    %261 = arith.negf %260 : vector<8x384xf32>
    %262 = math.exp %261 : vector<8x384xf32>
    %cst_47 = arith.constant 1.000000e+00 : f32
    %263 = vector.broadcast %cst_47 : f32 to vector<8x384xf32>
    %264 = arith.addf %263, %262 : vector<8x384xf32>
    %265 = arith.divf %263, %264 : vector<8x384xf32>
    %266 = vector.extract_strided_slice %265 {offsets = [0, 0], sizes = [8, 128], strides = [1, 1]} : vector<8x384xf32> to vector<8x128xf32>
    %267 = vector.extract_strided_slice %265 {offsets = [0, 128], sizes = [8, 128], strides = [1, 1]} : vector<8x384xf32> to vector<8x128xf32>
    %268 = vector.extract_strided_slice %265 {offsets = [0, 256], sizes = [8, 128], strides = [1, 1]} : vector<8x384xf32> to vector<8x128xf32>
    %269 = vector.extract_strided_slice %259 {offsets = [0, 384], sizes = [8, 128], strides = [1, 1]} : vector<8x512xf32> to vector<8x128xf32>
    %270 = math.tanh %269 : vector<8x128xf32>
    %271 = arith.mulf %267, %232 : vector<8x128xf32>
    %272 = arith.mulf %266, %270 : vector<8x128xf32>
    %273 = arith.addf %271, %272 : vector<8x128xf32>
    %274 = math.tanh %273 : vector<8x128xf32>
    %275 = arith.mulf %268, %274 : vector<8x128xf32>
    %276 = tpu.concatenate %275, %254 in 1 : vector<8x128xf32>, vector<8x128xf32> -> vector<8x256xf32>
    %277 = arith.truncf %276 : vector<8x256xf32> to vector<8x256xbf16>
    %cst_48 = arith.constant dense<0.000000e+00> : vector<8x512xf32>
    %278 = tpu.matmul %277, %1, %cst_48 {dimension_numbers = #tpu.dot_dimension_numbers<[1], [0], [0], [1], [0, 0, 1, 1], [], []>} : vector<8x256xbf16>, vector<256x512xbf16>, vector<8x512xf32> -> vector<8x512xf32>
    %279 = arith.addf %278, %4 : vector<8x512xf32>
    %280 = vector.extract_strided_slice %279 {offsets = [0, 0], sizes = [8, 384], strides = [1, 1]} : vector<8x512xf32> to vector<8x384xf32>
    %281 = arith.negf %280 : vector<8x384xf32>
    %282 = math.exp %281 : vector<8x384xf32>
    %cst_49 = arith.constant 1.000000e+00 : f32
    %283 = vector.broadcast %cst_49 : f32 to vector<8x384xf32>
    %284 = arith.addf %283, %282 : vector<8x384xf32>
    %285 = arith.divf %283, %284 : vector<8x384xf32>
    %286 = vector.extract_strided_slice %285 {offsets = [0, 0], sizes = [8, 128], strides = [1, 1]} : vector<8x384xf32> to vector<8x128xf32>
    %287 = vector.extract_strided_slice %285 {offsets = [0, 128], sizes = [8, 128], strides = [1, 1]} : vector<8x384xf32> to vector<8x128xf32>
    %288 = vector.extract_strided_slice %285 {offsets = [0, 256], sizes = [8, 128], strides = [1, 1]} : vector<8x384xf32> to vector<8x128xf32>
    %289 = vector.extract_strided_slice %279 {offsets = [0, 384], sizes = [8, 128], strides = [1, 1]} : vector<8x512xf32> to vector<8x128xf32>
    %290 = math.tanh %289 : vector<8x128xf32>
    %291 = arith.mulf %287, %252 : vector<8x128xf32>
    %292 = arith.mulf %286, %290 : vector<8x128xf32>
    %293 = arith.addf %291, %292 : vector<8x128xf32>
    %294 = math.tanh %293 : vector<8x128xf32>
    %295 = arith.mulf %288, %294 : vector<8x128xf32>
    %c7 = arith.constant 7 : index
    %c0_50 = arith.constant 0 : index
    %c0_51 = arith.constant 0 : index
    %296 = vector.load %arg0[%c7, %c0_50, %c0_51] : memref<8x8x512xf32, #tpu.memory_space<vmem>>, vector<1x8x512xf32>
    %297 = vector.shape_cast %296 : vector<1x8x512xf32> to vector<8x512xf32>
    %298 = arith.truncf %275 : vector<8x128xf32> to vector<8x128xbf16>
    %cst_52 = arith.constant dense<0.000000e+00> : vector<8x512xf32>
    %299 = tpu.matmul %298, %0, %cst_52 {dimension_numbers = #tpu.dot_dimension_numbers<[1], [0], [0], [1], [0, 0, 1, 1], [], []>} : vector<8x128xbf16>, vector<128x512xbf16>, vector<8x512xf32> -> vector<8x512xf32>
    %300 = arith.addf %297, %299 : vector<8x512xf32>
    %301 = vector.extract_strided_slice %300 {offsets = [0, 0], sizes = [8, 384], strides = [1, 1]} : vector<8x512xf32> to vector<8x384xf32>
    %302 = arith.negf %301 : vector<8x384xf32>
    %303 = math.exp %302 : vector<8x384xf32>
    %cst_53 = arith.constant 1.000000e+00 : f32
    %304 = vector.broadcast %cst_53 : f32 to vector<8x384xf32>
    %305 = arith.addf %304, %303 : vector<8x384xf32>
    %306 = arith.divf %304, %305 : vector<8x384xf32>
    %307 = vector.extract_strided_slice %306 {offsets = [0, 0], sizes = [8, 128], strides = [1, 1]} : vector<8x384xf32> to vector<8x128xf32>
    %308 = vector.extract_strided_slice %306 {offsets = [0, 128], sizes = [8, 128], strides = [1, 1]} : vector<8x384xf32> to vector<8x128xf32>
    %309 = vector.extract_strided_slice %306 {offsets = [0, 256], sizes = [8, 128], strides = [1, 1]} : vector<8x384xf32> to vector<8x128xf32>
    %310 = vector.extract_strided_slice %300 {offsets = [0, 384], sizes = [8, 128], strides = [1, 1]} : vector<8x512xf32> to vector<8x128xf32>
    %311 = math.tanh %310 : vector<8x128xf32>
    %312 = arith.mulf %308, %273 : vector<8x128xf32>
    %313 = arith.mulf %307, %311 : vector<8x128xf32>
    %314 = arith.addf %312, %313 : vector<8x128xf32>
    %315 = math.tanh %314 : vector<8x128xf32>
    %316 = arith.mulf %309, %315 : vector<8x128xf32>
    %317 = tpu.concatenate %316, %295 in 1 : vector<8x128xf32>, vector<8x128xf32> -> vector<8x256xf32>
    %318 = arith.truncf %317 : vector<8x256xf32> to vector<8x256xbf16>
    %cst_54 = arith.constant dense<0.000000e+00> : vector<8x512xf32>
    %319 = tpu.matmul %318, %1, %cst_54 {dimension_numbers = #tpu.dot_dimension_numbers<[1], [0], [0], [1], [0, 0, 1, 1], [], []>} : vector<8x256xbf16>, vector<256x512xbf16>, vector<8x512xf32> -> vector<8x512xf32>
    %320 = arith.addf %319, %4 : vector<8x512xf32>
    %321 = vector.extract_strided_slice %320 {offsets = [0, 0], sizes = [8, 384], strides = [1, 1]} : vector<8x512xf32> to vector<8x384xf32>
    %322 = arith.negf %321 : vector<8x384xf32>
    %323 = math.exp %322 : vector<8x384xf32>
    %cst_55 = arith.constant 1.000000e+00 : f32
    %324 = vector.broadcast %cst_55 : f32 to vector<8x384xf32>
    %325 = arith.addf %324, %323 : vector<8x384xf32>
    %326 = arith.divf %324, %325 : vector<8x384xf32>
    %327 = vector.extract_strided_slice %326 {offsets = [0, 0], sizes = [8, 128], strides = [1, 1]} : vector<8x384xf32> to vector<8x128xf32>
    %328 = vector.extract_strided_slice %326 {offsets = [0, 128], sizes = [8, 128], strides = [1, 1]} : vector<8x384xf32> to vector<8x128xf32>
    %329 = vector.extract_strided_slice %326 {offsets = [0, 256], sizes = [8, 128], strides = [1, 1]} : vector<8x384xf32> to vector<8x128xf32>
    %330 = vector.extract_strided_slice %320 {offsets = [0, 384], sizes = [8, 128], strides = [1, 1]} : vector<8x512xf32> to vector<8x128xf32>
    %331 = math.tanh %330 : vector<8x128xf32>
    %332 = arith.mulf %328, %293 : vector<8x128xf32>
    %333 = arith.mulf %327, %331 : vector<8x128xf32>
    %334 = arith.addf %332, %333 : vector<8x128xf32>
    %335 = math.tanh %334 : vector<8x128xf32>
    %336 = arith.mulf %329, %335 : vector<8x128xf32>
    %c0_56 = arith.constant 0 : index
    %c0_57 = arith.constant 0 : index
    %337 = vector.load %arg4[%c0_56, %c0_57] : memref<128x4xf32, #tpu.memory_space<vmem>>, vector<128x4xf32>
    %cst_58 = arith.constant dense<0.000000e+00> : vector<8x4xf32>
    %338 = tpu.matmul %336, %337, %cst_58 {dimension_numbers = #tpu.dot_dimension_numbers<[1], [0], [0], [1], [0, 0, 1, 1], [], []>} : vector<8x128xf32>, vector<128x4xf32>, vector<8x4xf32> -> vector<8x4xf32>
    %339 = arith.addf %338, %7 : vector<8x4xf32>
    %cst_59 = arith.constant dense<0xFF800000> : vector<8xf32>
    %340 = vector.multi_reduction <maximumf>, %339, %cst_59 [1] : vector<8x4xf32> to vector<8xf32>
    %341 = vector.shape_cast %340 : vector<8xf32> to vector<8x1xf32>
    %342 = vector.broadcast %341 : vector<8x1xf32> to vector<8x4xf32>
    %343 = arith.subf %339, %342 : vector<8x4xf32>
    %344 = math.exp %343 : vector<8x4xf32>
    %cst_60 = arith.constant dense<0.000000e+00> : vector<8xf32>
    %345 = vector.multi_reduction <add>, %344, %cst_60 [1] : vector<8x4xf32> to vector<8xf32>
    %346 = vector.shape_cast %345 : vector<8xf32> to vector<8x1xf32>
    %347 = tpu.reciprocal %346 : vector<8x1xf32> -> vector<8x1xf32>
    %348 = vector.broadcast %347 : vector<8x1xf32> to vector<8x4xf32>
    %349 = arith.mulf %344, %348 : vector<8x4xf32>
    %c0_61 = arith.constant 0 : index
    %c0_62 = arith.constant 0 : index
    %350 = vector.load %arg6[%c0_61, %c0_62] : memref<8x4xf32, #tpu.memory_space<vmem>>, vector<8x4xf32>
    tpu.vector_store %arg6[%c0_61, %c0_62], %349 {strides = array<i32>} : memref<8x4xf32, #tpu.memory_space<vmem>>, vector<8x4xf32>,
    return
  }
}

</mosaic_0001>

<llo_original>
// kernel: policy_network_forward.1
$region0: #{policy_network_forward.1}
  #allocation0 [shape = 'u32[]', space=smem, size = 0x4, offset = 0x4, fixed_abs, tag = 'smem constant byte address 0x4 - core index']
  #allocation1 [shape = 'u32[144,128]{1,0:T(1,128)}', space=vmem, size = 0x12000, scoped, tag = 'internal scratch']
  %s0 = inlined_call_operand.vmem [shape: f32[8,8,512], index: 0, kind: input, shape index: {}]
  %s1 = inlined_call_operand.vmem [shape: bf16[128,512], index: 1, kind: input, shape index: {}]
  %s2 = inlined_call_operand.vmem [shape: bf16[256,512], index: 2, kind: input, shape index: {}]
  %s3 = inlined_call_operand.vmem [shape: f32[1,512], index: 3, kind: input, shape index: {}]
  %s4 = inlined_call_operand.vmem [shape: f32[128,4], index: 4, kind: input, shape index: {}]
  %s5 = inlined_call_operand.vmem [shape: f32[1,4], index: 5, kind: input, shape index: {}]
  %s6 = inlined_call_operand.vmem [shape: f32[8,4], index: 6, kind: output, shape index: {}]
  %s7 = sld [smem:[#allocation0]]
  $region34: #{policy_network_forward.1} parent=0
    _
  %s9 = ssub.s32 1, %s7
  %s10 = scalar_select 0, %s9, %s7
  // Predicated region
  $region2: #{policy_network_forward.1} parent=0 // pred_check
    _
  $region3: #{policy_network_forward.1} parent=0 // pred_check_branch
    %12 = sbr.rel (0) target = $region5
  $region4: #{policy_network_forward.1} parent=0 // pred_region
    _
  $region5: #{policy_network_forward.1} parent=0 // pred_fallthru
    _
  // Predicated region
  $region6: #{policy_network_forward.1} parent=0 // pred_check
    _
  $region7: #{policy_network_forward.1} parent=0 // pred_check_branch
    %14 = sbr.rel (0) target = $region9
  $region8: #{policy_network_forward.1} parent=0 // pred_region
    _
  $region9: #{policy_network_forward.1} parent=0 // pred_fallthru
    _
  // Predicated region
  $region10: #{policy_network_forward.1} parent=0 // pred_check
    _
  $region11: #{policy_network_forward.1} parent=0 // pred_check_branch
    %16 = sbr.rel (0) target = $region13
  $region12: #{policy_network_forward.1} parent=0 // pred_region
    _
  $region13: #{policy_network_forward.1} parent=0 // pred_fallthru
    _
  // Predicated region
  $region14: #{policy_network_forward.1} parent=0 // pred_check
    _
  $region15: #{policy_network_forward.1} parent=0 // pred_check_branch
    %18 = sbr.rel (0) target = $region17
  $region16: #{policy_network_forward.1} parent=0 // pred_region
    _
  $region17: #{policy_network_forward.1} parent=0 // pred_fallthru
    _
  // Predicated region
  $region18: #{policy_network_forward.1} parent=0 // pred_check
    _
  $region19: #{policy_network_forward.1} parent=0 // pred_check_branch
    %20 = sbr.rel (0) target = $region21
  $region20: #{policy_network_forward.1} parent=0 // pred_region
    _
  $region21: #{policy_network_forward.1} parent=0 // pred_fallthru
    _
  // Predicated region
  $region22: #{policy_network_forward.1} parent=0 // pred_check
    _
  $region23: #{policy_network_forward.1} parent=0 // pred_check_branch
    %22 = sbr.rel (0) target = $region25
  $region24: #{policy_network_forward.1} parent=0 // pred_region
    _
  $region25: #{policy_network_forward.1} parent=0 // pred_fallthru
    _
  %v24 = vld [vmem:[%s1] sm:$0xff]
  %v25 = vld [vmem:[%s1 + $0x8] sm:$0xff]
  %v26 = vld [vmem:[%s1 + $0x10] sm:$0xff]
  %v27 = vld [vmem:[%s1 + $0x18] sm:$0xff]
  %v28 = vld [vmem:[%s1 + $0x20] sm:$0xff]
  %v29 = vld [vmem:[%s1 + $0x28] sm:$0xff]
  %v30 = vld [vmem:[%s1 + $0x30] sm:$0xff]
  %v31 = vld [vmem:[%s1 + $0x38] sm:$0xff]
  %v32 = vld [vmem:[%s1 + $0x40] sm:$0xff]
  %v33 = vld [vmem:[%s1 + $0x48] sm:$0xff]
  %v34 = vld [vmem:[%s1 + $0x50] sm:$0xff]
  %v35 = vld [vmem:[%s1 + $0x58] sm:$0xff]
  %v36 = vld [vmem:[%s1 + $0x60] sm:$0xff]
  %v37 = vld [vmem:[%s1 + $0x68] sm:$0xff]
  %v38 = vld [vmem:[%s1 + $0x70] sm:$0xff]
  %v39 = vld [vmem:[%s1 + $0x78] sm:$0xff]
  %v40 = vld [vmem:[%s1 + $0x80] sm:$0xff]
  %v41 = vld [vmem:[%s1 + $0x88] sm:$0xff]
  %v42 = vld [vmem:[%s1 + $0x90] sm:$0xff]
  %v43 = vld [vmem:[%s1 + $0x98] sm:$0xff]
  %v44 = vld [vmem:[%s1 + $0xa0] sm:$0xff]
  %v45 = vld [vmem:[%s1 + $0xa8] sm:$0xff]
  %v46 = vld [vmem:[%s1 + $0xb0] sm:$0xff]
  %v47 = vld [vmem:[%s1 + $0xb8] sm:$0xff]
  %v48 = vld [vmem:[%s1 + $0xc0] sm:$0xff]
  %v49 = vld [vmem:[%s1 + $0xc8] sm:$0xff]
  %v50 = vld [vmem:[%s1 + $0xd0] sm:$0xff]
  %v51 = vld [vmem:[%s1 + $0xd8] sm:$0xff]
  %v52 = vld [vmem:[%s1 + $0xe0] sm:$0xff]
  %v53 = vld [vmem:[%s1 + $0xe8] sm:$0xff]
  %v54 = vld [vmem:[%s1 + $0xf0] sm:$0xff]
  %v55 = vld [vmem:[%s1 + $0xf8] sm:$0xff]
  %v56 = vld [vmem:[%s2] sm:$0xff]
  %v57 = vld [vmem:[%s2 + $0x8] sm:$0xff]
  %v58 = vld [vmem:[%s2 + $0x10] sm:$0xff]
  %v59 = vld [vmem:[%s2 + $0x18] sm:$0xff]
  %v60 = vld [vmem:[%s2 + $0x20] sm:$0xff]
  %v61 = vld [vmem:[%s2 + $0x28] sm:$0xff]
  %v62 = vld [vmem:[%s2 + $0x30] sm:$0xff]
  %v63 = vld [vmem:[%s2 + $0x38] sm:$0xff]
  %v64 = vld [vmem:[%s2 + $0x40] sm:$0xff]
  %v65 = vld [vmem:[%s2 + $0x48] sm:$0xff]
  %v66 = vld [vmem:[%s2 + $0x50] sm:$0xff]
  %v67 = vld [vmem:[%s2 + $0x58] sm:$0xff]
  %v68 = vld [vmem:[%s2 + $0x60] sm:$0xff]
  %v69 = vld [vmem:[%s2 + $0x68] sm:$0xff]
  %v70 = vld [vmem:[%s2 + $0x70] sm:$0xff]
  %v71 = vld [vmem:[%s2 + $0x78] sm:$0xff]
  %v72 = vld [vmem:[%s2 + $0x80] sm:$0xff]
  %v73 = vld [vmem:[%s2 + $0x88] sm:$0xff]
  %v74 = vld [vmem:[%s2 + $0x90] sm:$0xff]
  %v75 = vld [vmem:[%s2 + $0x98] sm:$0xff]
  %v76 = vld [vmem:[%s2 + $0xa0] sm:$0xff]
  %v77 = vld [vmem:[%s2 + $0xa8] sm:$0xff]
  %v78 = vld [vmem:[%s2 + $0xb0] sm:$0xff]
  %v79 = vld [vmem:[%s2 + $0xb8] sm:$0xff]
  %v80 = vld [vmem:[%s2 + $0xc0] sm:$0xff]
  %v81 = vld [vmem:[%s2 + $0xc8] sm:$0xff]
  %v82 = vld [vmem:[%s2 + $0xd0] sm:$0xff]
  %v83 = vld [vmem:[%s2 + $0xd8] sm:$0xff]
  %v84 = vld [vmem:[%s2 + $0xe0] sm:$0xff]
  %v85 = vld [vmem:[%s2 + $0xe8] sm:$0xff]
  %v86 = vld [vmem:[%s2 + $0xf0] sm:$0xff]
  %v87 = vld [vmem:[%s2 + $0xf8] sm:$0xff]
  %v88 = vld [vmem:[%s2 + $0x100] sm:$0xff]
  %v89 = vld [vmem:[%s2 + $0x108] sm:$0xff]
  %v90 = vld [vmem:[%s2 + $0x110] sm:$0xff]
  %v91 = vld [vmem:[%s2 + $0x118] sm:$0xff]
  %v92 = vld [vmem:[%s2 + $0x120] sm:$0xff]
  %v93 = vld [vmem:[%s2 + $0x128] sm:$0xff]
  %v94 = vld [vmem:[%s2 + $0x130] sm:$0xff]
  %v95 = vld [vmem:[%s2 + $0x138] sm:$0xff]
  %v96 = vld [vmem:[%s2 + $0x140] sm:$0xff]
  %v97 = vld [vmem:[%s2 + $0x148] sm:$0xff]
  %v98 = vld [vmem:[%s2 + $0x150] sm:$0xff]
  %v99 = vld [vmem:[%s2 + $0x158] sm:$0xff]
  %v100 = vld [vmem:[%s2 + $0x160] sm:$0xff]
  %v101 = vld [vmem:[%s2 + $0x168] sm:$0xff]
  %v102 = vld [vmem:[%s2 + $0x170] sm:$0xff]
  %v103 = vld [vmem:[%s2 + $0x178] sm:$0xff]
  %v104 = vld [vmem:[%s2 + $0x180] sm:$0xff]
  %v105 = vld [vmem:[%s2 + $0x188] sm:$0xff]
  %v106 = vld [vmem:[%s2 + $0x190] sm:$0xff]
  %v107 = vld [vmem:[%s2 + $0x198] sm:$0xff]
  %v108 = vld [vmem:[%s2 + $0x1a0] sm:$0xff]
  %v109 = vld [vmem:[%s2 + $0x1a8] sm:$0xff]
  %v110 = vld [vmem:[%s2 + $0x1b0] sm:$0xff]
  %v111 = vld [vmem:[%s2 + $0x1b8] sm:$0xff]
  %v112 = vld [vmem:[%s2 + $0x1c0] sm:$0xff]
  %v113 = vld [vmem:[%s2 + $0x1c8] sm:$0xff]
  %v114 = vld [vmem:[%s2 + $0x1d0] sm:$0xff]
  %v115 = vld [vmem:[%s2 + $0x1d8] sm:$0xff]
  %v116 = vld [vmem:[%s2 + $0x1e0] sm:$0xff]
  %v117 = vld [vmem:[%s2 + $0x1e8] sm:$0xff]
  %v118 = vld [vmem:[%s2 + $0x1f0] sm:$0xff]
  %v119 = vld [vmem:[%s2 + $0x1f8] sm:$0xff]
  %v120 = vld [vmem:[%s3] sm:$0xf]
  %v122 = vlaneseq
  %v123 = vshrl.u32 %v122, 7
  %v124 = vsub.s32 0, %v123
  %v125 = vrot.slane %v120, %v124
  %v126 = vlaneseq
  %v127 = vshrl.u32 %v126, 7
  %v128 = vsub.s32 1, %v127
  %v129 = vrot.slane %v120, %v128
  %v130 = vlaneseq
  %v131 = vshrl.u32 %v130, 7
  %v132 = vsub.s32 2, %v131
  %v133 = vrot.slane %v120, %v132
  %v134 = vlaneseq
  %v135 = vshrl.u32 %v134, 7
  %v136 = vsub.s32 3, %v135
  %v137 = vrot.slane %v120, %v136
  %v142 = vld [vmem:[%s5] sm:$0x1]
  %v144 = vlaneseq
  %v145 = vshrl.u32 %v144, 7
  %v146 = vsub.s32 0, %v145
  %v147 = vrot.slane %v142, %v146
  %v149 = vld [vmem:[%s0] sm:$0xff]
  %v150 = vld [vmem:[%s0 + $0x8] sm:$0xff]
  %v151 = vld [vmem:[%s0 + $0x10] sm:$0xff]
  %v152 = vld [vmem:[%s0 + $0x18] sm:$0xff]
  %v185 = vunpack.c.l.b16 %v24
  %v186 = vunpack.c.h.b16 %v24
  %v187 = vunpack.c.l.b16 %v25
  %v188 = vunpack.c.h.b16 %v25
  %v189 = vunpack.c.l.b16 %v26
  %v190 = vunpack.c.h.b16 %v26
  %v191 = vunpack.c.l.b16 %v27
  %v192 = vunpack.c.h.b16 %v27
  %v193 = vunpack.c.l.b16 %v28
  %v194 = vunpack.c.h.b16 %v28
  %v195 = vunpack.c.l.b16 %v29
  %v196 = vunpack.c.h.b16 %v29
  %v197 = vunpack.c.l.b16 %v30
  %v198 = vunpack.c.h.b16 %v30
  %v199 = vunpack.c.l.b16 %v31
  %v200 = vunpack.c.h.b16 %v31
  %v201 = vunpack.c.l.b16 %v32
  %v202 = vunpack.c.h.b16 %v32
  %v203 = vunpack.c.l.b16 %v33
  %v204 = vunpack.c.h.b16 %v33
  %v205 = vunpack.c.l.b16 %v34
  %v206 = vunpack.c.h.b16 %v34
  %v207 = vunpack.c.l.b16 %v35
  %v208 = vunpack.c.h.b16 %v35
  %v209 = vunpack.c.l.b16 %v36
  %v210 = vunpack.c.h.b16 %v36
  %v211 = vunpack.c.l.b16 %v37
  %v212 = vunpack.c.h.b16 %v37
  %v213 = vunpack.c.l.b16 %v38
  %v214 = vunpack.c.h.b16 %v38
  %v215 = vunpack.c.l.b16 %v39
  %v216 = vunpack.c.h.b16 %v39
  %v217 = vunpack.c.l.b16 %v40
  %v218 = vunpack.c.h.b16 %v40
  %v219 = vunpack.c.l.b16 %v41
  %v220 = vunpack.c.h.b16 %v41
  %v221 = vunpack.c.l.b16 %v42
  %v222 = vunpack.c.h.b16 %v42
  %v223 = vunpack.c.l.b16 %v43
  %v224 = vunpack.c.h.b16 %v43
  %v225 = vunpack.c.l.b16 %v44
  %v226 = vunpack.c.h.b16 %v44
  %v227 = vunpack.c.l.b16 %v45
  %v228 = vunpack.c.h.b16 %v45
  %v229 = vunpack.c.l.b16 %v46
  %v230 = vunpack.c.h.b16 %v46
  %v231 = vunpack.c.l.b16 %v47
  %v232 = vunpack.c.h.b16 %v47
  %v233 = vunpack.c.l.b16 %v48
  %v234 = vunpack.c.h.b16 %v48
  %v235 = vunpack.c.l.b16 %v49
  %v236 = vunpack.c.h.b16 %v49
  %v237 = vunpack.c.l.b16 %v50
  %v238 = vunpack.c.h.b16 %v50
  %v239 = vunpack.c.l.b16 %v51
  %v240 = vunpack.c.h.b16 %v51
  %v241 = vunpack.c.l.b16 %v52
  %v242 = vunpack.c.h.b16 %v52
  %v243 = vunpack.c.l.b16 %v53
  %v244 = vunpack.c.h.b16 %v53
  %v245 = vunpack.c.l.b16 %v54
  %v246 = vunpack.c.h.b16 %v54
  %v247 = vunpack.c.l.b16 %v55
  %v248 = vunpack.c.h.b16 %v55
  %v249 = vpack.c.b16 %v189, %v185
  %v250 = vpack.c.b16 %v190, %v186
  %v251 = vpack.c.b16 %v191, %v187
  %v252 = vpack.c.b16 %v192, %v188
  %v253 = vpack.c.b16 %v197, %v193
  %v254 = vpack.c.b16 %v198, %v194
  %v255 = vpack.c.b16 %v199, %v195
  %v256 = vpack.c.b16 %v200, %v196
  %v257 = vpack.c.b16 %v205, %v201
  %v258 = vpack.c.b16 %v206, %v202
  %v259 = vpack.c.b16 %v207, %v203
  %v260 = vpack.c.b16 %v208, %v204
  %v261 = vpack.c.b16 %v213, %v209
  %v262 = vpack.c.b16 %v214, %v210
  %v263 = vpack.c.b16 %v215, %v211
  %v264 = vpack.c.b16 %v216, %v212
  %v265 = vpack.c.b16 %v221, %v217
  %v266 = vpack.c.b16 %v222, %v218
  %v267 = vpack.c.b16 %v223, %v219
  %v268 = vpack.c.b16 %v224, %v220
  %v269 = vpack.c.b16 %v229, %v225
  %v270 = vpack.c.b16 %v230, %v226
  %v271 = vpack.c.b16 %v231, %v227
  %v272 = vpack.c.b16 %v232, %v228
  %v273 = vpack.c.b16 %v237, %v233
  %v274 = vpack.c.b16 %v238, %v234
  %v275 = vpack.c.b16 %v239, %v235
  %v276 = vpack.c.b16 %v240, %v236
  %v277 = vpack.c.b16 %v245, %v241
  %v278 = vpack.c.b16 %v246, %v242
  %v279 = vpack.c.b16 %v247, %v243
  %v280 = vpack.c.b16 %v248, %v244
  %313 = vmatprep.subr.bf16.mxu0 %v278
  %314 = vmatpush1.bf16.msra.mxu0 %v277
  %315 = vmatprep.subr.bf16.mxu0 %v274
  %316 = vmatpush1.bf16.msra.mxu0 %v273
  %317 = vmatprep.subr.bf16.mxu0 %v270
  %318 = vmatpush1.bf16.msra.mxu0 %v269
  %319 = vmatprep.subr.bf16.mxu0 %v266
  %320 = vmatpush1.bf16.msra.mxu0 %v265
  %321 = vmatprep.subr.bf16.mxu0 %v262
  %322 = vmatpush1.bf16.msra.mxu0 %v261
  %323 = vmatprep.subr.bf16.mxu0 %v258
  %324 = vmatpush1.bf16.msra.mxu0 %v257
  %325 = vmatprep.subr.bf16.mxu0 %v254
  %326 = vmatpush1.bf16.msra.mxu0 %v253
  %327 = vmatprep.subr.bf16.mxu0 %v250
  %328 = vmatpush1.bf16.msra.mxu0 %v249
  %329 = vmatprep.subr.bf16.mxu0 0
  %330 = vmatpush2.bf16.msra.mxu0 0
  %331 = vmatprep.subr.bf16.mxu0 0
  %332 = vmatpush2.bf16.msra.mxu0 0
  %333 = vmatprep.subr.bf16.mxu0 0
  %334 = vmatpush2.bf16.msra.mxu0 0
  %335 = vmatprep.subr.bf16.mxu0 0
  %336 = vmatpush2.bf16.msra.mxu0 0
  %337 = vmatprep.subr.bf16.mxu0 0
  %338 = vmatpush2.bf16.msra.mxu0 0
  %339 = vmatprep.subr.bf16.mxu0 0
  %340 = vmatpush2.bf16.msra.mxu0 0
  %341 = vmatprep.subr.bf16.mxu0 0
  %342 = vmatpush2.bf16.msra.mxu0 0
  %343 = vmatprep.subr.bf16.mxu0 0
  %344 = vmatpush2.bf16.msra.mxu0 0
  %345 = vmatprep.mubr.bf16.mxu0 0
  %346 = vmatmul.mubr.bf16.gmra.mxu0 0
  %v347 = vpop.f32.mrf.mxu0
  %v348 = vadd.f32 0.0, %v347
  %v349 = vpop.f32.mrf.mxu0
  %v350 = vadd.f32 0.0, %v349
  %v351 = vpop.f32.mrf.mxu0
  %v352 = vpop.f32.mrf.mxu0
  %353 = vdwg.mxu0
  %354 = vmatprep.subr.bf16.mxu0 %v280
  %355 = vmatpush1.bf16.msra.mxu0 %v279
  %356 = vmatprep.subr.bf16.mxu0 %v276
  %357 = vmatpush1.bf16.msra.mxu0 %v275
  %358 = vmatprep.subr.bf16.mxu0 %v272
  %359 = vmatpush1.bf16.msra.mxu0 %v271
  %360 = vmatprep.subr.bf16.mxu0 %v268
  %361 = vmatpush1.bf16.msra.mxu0 %v267
  %362 = vmatprep.subr.bf16.mxu0 %v264
  %363 = vmatpush1.bf16.msra.mxu0 %v263
  %364 = vmatprep.subr.bf16.mxu0 %v260
  %365 = vmatpush1.bf16.msra.mxu0 %v259
  %366 = vmatprep.subr.bf16.mxu0 %v256
  %367 = vmatpush1.bf16.msra.mxu0 %v255
  %368 = vmatprep.subr.bf16.mxu0 %v252
  %369 = vmatpush1.bf16.msra.mxu0 %v251
  %370 = vmatprep.subr.bf16.mxu0 0
  %371 = vmatpush2.bf16.msra.mxu0 0
  %372 = vmatprep.subr.bf16.mxu0 0
  %373 = vmatpush2.bf16.msra.mxu0 0
  %374 = vmatprep.subr.bf16.mxu0 0
  %375 = vmatpush2.bf16.msra.mxu0 0
  %376 = vmatprep.subr.bf16.mxu0 0
  %377 = vmatpush2.bf16.msra.mxu0 0
  %378 = vmatprep.subr.bf16.mxu0 0
  %379 = vmatpush2.bf16.msra.mxu0 0
  %380 = vmatprep.subr.bf16.mxu0 0
  %381 = vmatpush2.bf16.msra.mxu0 0
  %382 = vmatprep.subr.bf16.mxu0 0
  %383 = vmatpush2.bf16.msra.mxu0 0
  %384 = vmatprep.subr.bf16.mxu0 0
  %385 = vmatpush2.bf16.msra.mxu0 0
  %386 = vmatprep.mubr.bf16.mxu0 0
  %387 = vmatmul.mubr.bf16.gmra.mxu0 0
  %v388 = vpop.f32.mrf.mxu0
  %v389 = vadd.f32 0.0, %v388
  %v390 = vpop.f32.mrf.mxu0
  %v391 = vadd.f32 0.0, %v390
  %v392 = vpop.f32.mrf.mxu0
  %v393 = vpop.f32.mrf.mxu0
  %394 = vdwg.mxu0
  %v395 = vadd.f32 %v149, %v348
  %v396 = vadd.f32 %v150, %v350
  %v397 = vadd.f32 %v151, %v389
  %v398 = vadd.f32 %v152, %v391
  %v399 = vxor.u32 %v395, 2147483648
  %v400 = vxor.u32 %v396, 2147483648
  %v401 = vxor.u32 %v397, 2147483648
  %v402 = vmul.f32 %v399, 1.442695
  %v403 = vpow.pop %v402
  %v404 = vmul.f32 %v400, 1.442695
  %v405 = vpow.pop %v404
  %v406 = vmul.f32 %v401, 1.442695
  %v407 = vpow.pop %v406
  %v408 = vadd.f32 %v403, 1.0
  %v409 = vadd.f32 %v405, 1.0
  %v410 = vadd.f32 %v407, 1.0
  %v411 = vrcp.pop %v408
  %v412 = vmul.f32 1.0, %v411
  %v413 = vrcp.pop %v409
  %v414 = vmul.f32 1.0, %v413
  %v415 = vrcp.pop %v410
  %v416 = vmul.f32 1.0, %v415
  %v417 = vtanh.pop %v398
  %v418 = vmul.f32 %v414, 0.0
  %v419 = vmul.f32 %v412, %v417
  %v420 = vadd.f32 %v418, %v419
  %v421 = vtanh.pop %v420
  %v422 = vmul.f32 %v416, %v421
  %v423 = vpack.c.bf16 %v422, %v422
  %v424 = vpack.c.bf16 0.0, 0.0
  %v489 = vunpack.c.l.b16 %v56
  %v490 = vunpack.c.h.b16 %v56
  %v491 = vunpack.c.l.b16 %v57
  %v492 = vunpack.c.h.b16 %v57
  %v493 = vunpack.c.l.b16 %v58
  %v494 = vunpack.c.h.b16 %v58
  %v495 = vunpack.c.l.b16 %v59
  %v496 = vunpack.c.h.b16 %v59
  %v497 = vunpack.c.l.b16 %v60
  %v498 = vunpack.c.h.b16 %v60
  %v499 = vunpack.c.l.b16 %v61
  %v500 = vunpack.c.h.b16 %v61
  %v501 = vunpack.c.l.b16 %v62
  %v502 = vunpack.c.h.b16 %v62
  %v503 = vunpack.c.l.b16 %v63
  %v504 = vunpack.c.h.b16 %v63
  %v505 = vunpack.c.l.b16 %v64
  %v506 = vunpack.c.h.b16 %v64
  %v507 = vunpack.c.l.b16 %v65
  %v508 = vunpack.c.h.b16 %v65
  %v509 = vunpack.c.l.b16 %v66
  %v510 = vunpack.c.h.b16 %v66
  %v511 = vunpack.c.l.b16 %v67
  %v512 = vunpack.c.h.b16 %v67
  %v513 = vunpack.c.l.b16 %v68
  %v514 = vunpack.c.h.b16 %v68
  %v515 = vunpack.c.l.b16 %v69
  %v516 = vunpack.c.h.b16 %v69
  %v517 = vunpack.c.l.b16 %v70
  %v518 = vunpack.c.h.b16 %v70
  %v519 = vunpack.c.l.b16 %v71
  %v520 = vunpack.c.h.b16 %v71
  %v521 = vunpack.c.l.b16 %v72
  %v522 = vunpack.c.h.b16 %v72
  %v523 = vunpack.c.l.b16 %v73
  %v524 = vunpack.c.h.b16 %v73
  %v525 = vunpack.c.l.b16 %v74
  %v526 = vunpack.c.h.b16 %v74
  %v527 = vunpack.c.l.b16 %v75
  %v528 = vunpack.c.h.b16 %v75
  %v529 = vunpack.c.l.b16 %v76
  %v530 = vunpack.c.h.b16 %v76
  %v531 = vunpack.c.l.b16 %v77
  %v532 = vunpack.c.h.b16 %v77
  %v533 = vunpack.c.l.b16 %v78
  %v534 = vunpack.c.h.b16 %v78
  %v535 = vunpack.c.l.b16 %v79
  %v536 = vunpack.c.h.b16 %v79
  %v537 = vunpack.c.l.b16 %v80
  %v538 = vunpack.c.h.b16 %v80
  %v539 = vunpack.c.l.b16 %v81
  %v540 = vunpack.c.h.b16 %v81
  %v541 = vunpack.c.l.b16 %v82
  %v542 = vunpack.c.h.b16 %v82
  %v543 = vunpack.c.l.b16 %v83
  %v544 = vunpack.c.h.b16 %v83
  %v545 = vunpack.c.l.b16 %v84
  %v546 = vunpack.c.h.b16 %v84
  %v547 = vunpack.c.l.b16 %v85
  %v548 = vunpack.c.h.b16 %v85
  %v549 = vunpack.c.l.b16 %v86
  %v550 = vunpack.c.h.b16 %v86
  %v551 = vunpack.c.l.b16 %v87
  %v552 = vunpack.c.h.b16 %v87
  %v553 = vunpack.c.l.b16 %v88
  %v554 = vunpack.c.h.b16 %v88
  %v555 = vunpack.c.l.b16 %v89
  %v556 = vunpack.c.h.b16 %v89
  %v557 = vunpack.c.l.b16 %v90
  %v558 = vunpack.c.h.b16 %v90
  %v559 = vunpack.c.l.b16 %v91
  %v560 = vunpack.c.h.b16 %v91
  %v561 = vunpack.c.l.b16 %v92
  %v562 = vunpack.c.h.b16 %v92
  %v563 = vunpack.c.l.b16 %v93
  %v564 = vunpack.c.h.b16 %v93
  %v565 = vunpack.c.l.b16 %v94
  %v566 = vunpack.c.h.b16 %v94
  %v567 = vunpack.c.l.b16 %v95
  %v568 = vunpack.c.h.b16 %v95
  %v569 = vunpack.c.l.b16 %v96
  %v570 = vunpack.c.h.b16 %v96
  %v571 = vunpack.c.l.b16 %v97
  %v572 = vunpack.c.h.b16 %v97
  %v573 = vunpack.c.l.b16 %v98
  %v574 = vunpack.c.h.b16 %v98
  %v575 = vunpack.c.l.b16 %v99
  %v576 = vunpack.c.h.b16 %v99
  %v577 = vunpack.c.l.b16 %v100
  %v578 = vunpack.c.h.b16 %v100
  %v579 = vunpack.c.l.b16 %v101
  %v580 = vunpack.c.h.b16 %v101
  %v581 = vunpack.c.l.b16 %v102
  %v582 = vunpack.c.h.b16 %v102
  %v583 = vunpack.c.l.b16 %v103
  %v584 = vunpack.c.h.b16 %v103
  %v585 = vunpack.c.l.b16 %v104
  %v586 = vunpack.c.h.b16 %v104
  %v587 = vunpack.c.l.b16 %v105
  %v588 = vunpack.c.h.b16 %v105
  %v589 = vunpack.c.l.b16 %v106
  %v590 = vunpack.c.h.b16 %v106
  %v591 = vunpack.c.l.b16 %v107
  %v592 = vunpack.c.h.b16 %v107
  %v593 = vunpack.c.l.b16 %v108
  %v594 = vunpack.c.h.b16 %v108
  %v595 = vunpack.c.l.b16 %v109
  %v596 = vunpack.c.h.b16 %v109
  %v597 = vunpack.c.l.b16 %v110
  %v598 = vunpack.c.h.b16 %v110
  %v599 = vunpack.c.l.b16 %v111
  %v600 = vunpack.c.h.b16 %v111
  %v601 = vunpack.c.l.b16 %v112
  %v602 = vunpack.c.h.b16 %v112
  %v603 = vunpack.c.l.b16 %v113
  %v604 = vunpack.c.h.b16 %v113
  %v605 = vunpack.c.l.b16 %v114
  %v606 = vunpack.c.h.b16 %v114
  %v607 = vunpack.c.l.b16 %v115
  %v608 = vunpack.c.h.b16 %v115
  %v609 = vunpack.c.l.b16 %v116
  %v610 = vunpack.c.h.b16 %v116
  %v611 = vunpack.c.l.b16 %v117
  %v612 = vunpack.c.h.b16 %v117
  %v613 = vunpack.c.l.b16 %v118
  %v614 = vunpack.c.h.b16 %v118
  %v615 = vunpack.c.l.b16 %v119
  %v616 = vunpack.c.h.b16 %v119
  %v617 = vpack.c.b16 %v493, %v489
  %v618 = vpack.c.b16 %v494, %v490
  %v619 = vpack.c.b16 %v495, %v491
  %v620 = vpack.c.b16 %v496, %v492
  %v621 = vpack.c.b16 %v501, %v497
  %v622 = vpack.c.b16 %v502, %v498
  %v623 = vpack.c.b16 %v503, %v499
  %v624 = vpack.c.b16 %v504, %v500
  %v625 = vpack.c.b16 %v509, %v505
  %v626 = vpack.c.b16 %v510, %v506
  %v627 = vpack.c.b16 %v511, %v507
  %v628 = vpack.c.b16 %v512, %v508
  %v629 = vpack.c.b16 %v517, %v513
  %v630 = vpack.c.b16 %v518, %v514
  %v631 = vpack.c.b16 %v519, %v515
  %v632 = vpack.c.b16 %v520, %v516
  %v633 = vpack.c.b16 %v525, %v521
  %v634 = vpack.c.b16 %v526, %v522
  %v635 = vpack.c.b16 %v527, %v523
  %v636 = vpack.c.b16 %v528, %v524
  %v637 = vpack.c.b16 %v533, %v529
  %v638 = vpack.c.b16 %v534, %v530
  %v639 = vpack.c.b16 %v535, %v531
  %v640 = vpack.c.b16 %v536, %v532
  %v641 = vpack.c.b16 %v541, %v537
  %v642 = vpack.c.b16 %v542, %v538
  %v643 = vpack.c.b16 %v543, %v539
  %v644 = vpack.c.b16 %v544, %v540
  %v645 = vpack.c.b16 %v549, %v545
  %v646 = vpack.c.b16 %v550, %v546
  %v647 = vpack.c.b16 %v551, %v547
  %v648 = vpack.c.b16 %v552, %v548
  %v649 = vpack.c.b16 %v557, %v553
  %v650 = vpack.c.b16 %v558, %v554
  %v651 = vpack.c.b16 %v559, %v555
  %v652 = vpack.c.b16 %v560, %v556
  %v653 = vpack.c.b16 %v565, %v561
  %v654 = vpack.c.b16 %v566, %v562
  %v655 = vpack.c.b16 %v567, %v563
  %v656 = vpack.c.b16 %v568, %v564
  %v657 = vpack.c.b16 %v573, %v569
  %v658 = vpack.c.b16 %v574, %v570
  %v659 = vpack.c.b16 %v575, %v571
  %v660 = vpack.c.b16 %v576, %v572
  %v661 = vpack.c.b16 %v581, %v577
  %v662 = vpack.c.b16 %v582, %v578
  %v663 = vpack.c.b16 %v583, %v579
  %v664 = vpack.c.b16 %v584, %v580
  %v665 = vpack.c.b16 %v589, %v585
  %v666 = vpack.c.b16 %v590, %v586
  %v667 = vpack.c.b16 %v591, %v587
  %v668 = vpack.c.b16 %v592, %v588
  %v669 = vpack.c.b16 %v597, %v593
  %v670 = vpack.c.b16 %v598, %v594
  %v671 = vpack.c.b16 %v599, %v595
  %v672 = vpack.c.b16 %v600, %v596
  %v673 = vpack.c.b16 %v605, %v601
  %v674 = vpack.c.b16 %v606, %v602
  %v675 = vpack.c.b16 %v607, %v603
  %v676 = vpack.c.b16 %v608, %v604
  %v677 = vpack.c.b16 %v613, %v609
  %v678 = vpack.c.b16 %v614, %v610
  %v679 = vpack.c.b16 %v615, %v611
  %v680 = vpack.c.b16 %v616, %v612
  %745 = vmatprep.subr.bf16.mxu0 %v646
  %746 = vmatpush1.bf16.msra.mxu0 %v645
  %747 = vmatprep.subr.bf16.mxu0 %v642
  %748 = vmatpush1.bf16.msra.mxu0 %v641
  %749 = vmatprep.subr.bf16.mxu0 %v638
  %750 = vmatpush1.bf16.msra.mxu0 %v637
  %751 = vmatprep.subr.bf16.mxu0 %v634
  %752 = vmatpush1.bf16.msra.mxu0 %v633
  %753 = vmatprep.subr.bf16.mxu0 %v630
  %754 = vmatpush1.bf16.msra.mxu0 %v629
  %755 = vmatprep.subr.bf16.mxu0 %v626
  %756 = vmatpush1.bf16.msra.mxu0 %v625
  %757 = vmatprep.subr.bf16.mxu0 %v622
  %758 = vmatpush1.bf16.msra.mxu0 %v621
  %759 = vmatprep.subr.bf16.mxu0 %v618
  %760 = vmatpush1.bf16.msra.mxu0 %v617
  %761 = vmatprep.subr.bf16.mxu0 %v678
  %762 = vmatpush2.bf16.msra.mxu0 %v677
  %763 = vmatprep.subr.bf16.mxu0 %v674
  %764 = vmatpush2.bf16.msra.mxu0 %v673
  %765 = vmatprep.subr.bf16.mxu0 %v670
  %766 = vmatpush2.bf16.msra.mxu0 %v669
  %767 = vmatprep.subr.bf16.mxu0 %v666
  %768 = vmatpush2.bf16.msra.mxu0 %v665
  %769 = vmatprep.subr.bf16.mxu0 %v662
  %770 = vmatpush2.bf16.msra.mxu0 %v661
  %771 = vmatprep.subr.bf16.mxu0 %v658
  %772 = vmatpush2.bf16.msra.mxu0 %v657
  %773 = vmatprep.subr.bf16.mxu0 %v654
  %774 = vmatpush2.bf16.msra.mxu0 %v653
  %775 = vmatprep.subr.bf16.mxu0 %v650
  %776 = vmatpush2.bf16.msra.mxu0 %v649
  %777 = vmatprep.mubr.bf16.mxu0 %v424
  %778 = vmatmul.mubr.bf16.gmra.mxu0 %v423
  %v779 = vpop.f32.mrf.mxu0
  %v780 = vadd.f32 %v125, %v779
  %v781 = vpop.f32.mrf.mxu0
  %v782 = vadd.f32 %v129, %v781
  %v783 = vpop.f32.mrf.mxu0
  %v784 = vpop.f32.mrf.mxu0
  %785 = vdwg.mxu0
  %786 = vmatprep.subr.bf16.mxu0 %v648
  %787 = vmatpush1.bf16.msra.mxu0 %v647
  %788 = vmatprep.subr.bf16.mxu0 %v644
  %789 = vmatpush1.bf16.msra.mxu0 %v643
  %790 = vmatprep.subr.bf16.mxu0 %v640
  %791 = vmatpush1.bf16.msra.mxu0 %v639
  %792 = vmatprep.subr.bf16.mxu0 %v636
  %793 = vmatpush1.bf16.msra.mxu0 %v635
  %794 = vmatprep.subr.bf16.mxu0 %v632
  %795 = vmatpush1.bf16.msra.mxu0 %v631
  %796 = vmatprep.subr.bf16.mxu0 %v628
  %797 = vmatpush1.bf16.msra.mxu0 %v627
  %798 = vmatprep.subr.bf16.mxu0 %v624
  %799 = vmatpush1.bf16.msra.mxu0 %v623
  %800 = vmatprep.subr.bf16.mxu0 %v620
  %801 = vmatpush1.bf16.msra.mxu0 %v619
  %802 = vmatprep.subr.bf16.mxu0 %v680
  %803 = vmatpush2.bf16.msra.mxu0 %v679
  %804 = vmatprep.subr.bf16.mxu0 %v676
  %805 = vmatpush2.bf16.msra.mxu0 %v675
  %806 = vmatprep.subr.bf16.mxu0 %v672
  %807 = vmatpush2.bf16.msra.mxu0 %v671
  %808 = vmatprep.subr.bf16.mxu0 %v668
  %809 = vmatpush2.bf16.msra.mxu0 %v667
  %810 = vmatprep.subr.bf16.mxu0 %v664
  %811 = vmatpush2.bf16.msra.mxu0 %v663
  %812 = vmatprep.subr.bf16.mxu0 %v660
  %813 = vmatpush2.bf16.msra.mxu0 %v659
  %814 = vmatprep.subr.bf16.mxu0 %v656
  %815 = vmatpush2.bf16.msra.mxu0 %v655
  %816 = vmatprep.subr.bf16.mxu0 %v652
  %817 = vmatpush2.bf16.msra.mxu0 %v651
  %818 = vmatprep.mubr.bf16.mxu0 %v424
  %819 = vmatmul.mubr.bf16.gmra.mxu0 %v423
  %v820 = vpop.f32.mrf.mxu0
  %v821 = vadd.f32 %v133, %v820
  %v822 = vpop.f32.mrf.mxu0
  %v823 = vadd.f32 %v137, %v822
  %v824 = vpop.f32.mrf.mxu0
  %v825 = vpop.f32.mrf.mxu0
  %826 = vdwg.mxu0
  %v827 = vxor.u32 %v780, 2147483648
  %v828 = vxor.u32 %v782, 2147483648
  %v829 = vxor.u32 %v821, 2147483648
  %v830 = vmul.f32 %v827, 1.442695
  %v831 = vpow.pop %v830
  %v832 = vmul.f32 %v828, 1.442695
  %v833 = vpow.pop %v832
  %v834 = vmul.f32 %v829, 1.442695
  %v835 = vpow.pop %v834
  %v836 = vadd.f32 %v831, 1.0
  %v837 = vadd.f32 %v833, 1.0
  %v838 = vadd.f32 %v835, 1.0
  %v839 = vrcp.pop %v836
  %v840 = vmul.f32 1.0, %v839
  %v841 = vrcp.pop %v837
  %v842 = vmul.f32 1.0, %v841
  %v843 = vrcp.pop %v838
  %v844 = vmul.f32 1.0, %v843
  %v845 = vtanh.pop %v823
  %v846 = vmul.f32 %v842, 0.0
  %v847 = vmul.f32 %v840, %v845
  %v848 = vadd.f32 %v846, %v847
  %v849 = vtanh.pop %v848
  %v850 = vmul.f32 %v844, %v849
  %s851 = scalar_lea.vmem %s0, 32
  %v852 = vld [vmem:[%s851] sm:$0xff]
  %v853 = vld [vmem:[%s851 + $0x8] sm:$0xff]
  %v854 = vld [vmem:[%s851 + $0x10] sm:$0xff]
  %v855 = vld [vmem:[%s851 + $0x18] sm:$0xff]
  %856 = vmatprep.subr.bf16.mxu0 %v278
  %857 = vmatpush1.bf16.msra.mxu0 %v277
  %858 = vmatprep.subr.bf16.mxu0 %v274
  %859 = vmatpush1.bf16.msra.mxu0 %v273
  %860 = vmatprep.subr.bf16.mxu0 %v270
  %861 = vmatpush1.bf16.msra.mxu0 %v269
  %862 = vmatprep.subr.bf16.mxu0 %v266
  %863 = vmatpush1.bf16.msra.mxu0 %v265
  %864 = vmatprep.subr.bf16.mxu0 %v262
  %865 = vmatpush1.bf16.msra.mxu0 %v261
  %866 = vmatprep.subr.bf16.mxu0 %v258
  %867 = vmatpush1.bf16.msra.mxu0 %v257
  %868 = vmatprep.subr.bf16.mxu0 %v254
  %869 = vmatpush1.bf16.msra.mxu0 %v253
  %870 = vmatprep.subr.bf16.mxu0 %v250
  %871 = vmatpush1.bf16.msra.mxu0 %v249
  %872 = vmatprep.subr.bf16.mxu0 0
  %873 = vmatpush2.bf16.msra.mxu0 0
  %874 = vmatprep.subr.bf16.mxu0 0
  %875 = vmatpush2.bf16.msra.mxu0 0
  %876 = vmatprep.subr.bf16.mxu0 0
  %877 = vmatpush2.bf16.msra.mxu0 0
  %878 = vmatprep.subr.bf16.mxu0 0
  %879 = vmatpush2.bf16.msra.mxu0 0
  %880 = vmatprep.subr.bf16.mxu0 0
  %881 = vmatpush2.bf16.msra.mxu0 0
  %882 = vmatprep.subr.bf16.mxu0 0
  %883 = vmatpush2.bf16.msra.mxu0 0
  %884 = vmatprep.subr.bf16.mxu0 0
  %885 = vmatpush2.bf16.msra.mxu0 0
  %886 = vmatprep.subr.bf16.mxu0 0
  %887 = vmatpush2.bf16.msra.mxu0 0
  %888 = vmatprep.mubr.bf16.mxu0 0
  %889 = vmatmul.mubr.bf16.gmra.mxu0 %v423
  %v890 = vpop.f32.mrf.mxu0
  %v891 = vadd.f32 0.0, %v890
  %v892 = vpop.f32.mrf.mxu0
  %v893 = vadd.f32 0.0, %v892
  %v894 = vpop.f32.mrf.mxu0
  %v895 = vpop.f32.mrf.mxu0
  %896 = vdwg.mxu0
  %897 = vmatprep.subr.bf16.mxu0 %v280
  %898 = vmatpush1.bf16.msra.mxu0 %v279
  %899 = vmatprep.subr.bf16.mxu0 %v276
  %900 = vmatpush1.bf16.msra.mxu0 %v275
  %901 = vmatprep.subr.bf16.mxu0 %v272
  %902 = vmatpush1.bf16.msra.mxu0 %v271
  %903 = vmatprep.subr.bf16.mxu0 %v268
  %904 = vmatpush1.bf16.msra.mxu0 %v267
  %905 = vmatprep.subr.bf16.mxu0 %v264
  %906 = vmatpush1.bf16.msra.mxu0 %v263
  %907 = vmatprep.subr.bf16.mxu0 %v260
  %908 = vmatpush1.bf16.msra.mxu0 %v259
  %909 = vmatprep.subr.bf16.mxu0 %v256
  %910 = vmatpush1.bf16.msra.mxu0 %v255
  %911 = vmatprep.subr.bf16.mxu0 %v252
  %912 = vmatpush1.bf16.msra.mxu0 %v251
  %913 = vmatprep.subr.bf16.mxu0 0
  %914 = vmatpush2.bf16.msra.mxu0 0
  %915 = vmatprep.subr.bf16.mxu0 0
  %916 = vmatpush2.bf16.msra.mxu0 0
  %917 = vmatprep.subr.bf16.mxu0 0
  %918 = vmatpush2.bf16.msra.mxu0 0
  %919 = vmatprep.subr.bf16.mxu0 0
  %920 = vmatpush2.bf16.msra.mxu0 0
  %921 = vmatprep.subr.bf16.mxu0 0
  %922 = vmatpush2.bf16.msra.mxu0 0
  %923 = vmatprep.subr.bf16.mxu0 0
  %924 = vmatpush2.bf16.msra.mxu0 0
  %925 = vmatprep.subr.bf16.mxu0 0
  %926 = vmatpush2.bf16.msra.mxu0 0
  %927 = vmatprep.subr.bf16.mxu0 0
  %928 = vmatpush2.bf16.msra.mxu0 0
  %929 = vmatprep.mubr.bf16.mxu0 0
  %930 = vmatmul.mubr.bf16.gmra.mxu0 %v423
  %v931 = vpop.f32.mrf.mxu0
  %v932 = vadd.f32 0.0, %v931
  %v933 = vpop.f32.mrf.mxu0
  %v934 = vadd.f32 0.0, %v933
  %v935 = vpop.f32.mrf.mxu0
  %v936 = vpop.f32.mrf.mxu0
  %937 = vdwg.mxu0
  %v938 = vadd.f32 %v852, %v891
  %v939 = vadd.f32 %v853, %v893
  %v940 = vadd.f32 %v854, %v932
  %v941 = vadd.f32 %v855, %v934
  %v942 = vxor.u32 %v938, 2147483648
  %v943 = vxor.u32 %v939, 2147483648
  %v944 = vxor.u32 %v940, 2147483648
  %v945 = vmul.f32 %v942, 1.442695
  %v946 = vpow.pop %v945
  %v947 = vmul.f32 %v943, 1.442695
  %v948 = vpow.pop %v947
  %v949 = vmul.f32 %v944, 1.442695
  %v950 = vpow.pop %v949
  %v951 = vadd.f32 %v946, 1.0
  %v952 = vadd.f32 %v948, 1.0
  %v953 = vadd.f32 %v950, 1.0
  %v954 = vrcp.pop %v951
  %v955 = vmul.f32 1.0, %v954
  %v956 = vrcp.pop %v952
  %v957 = vmul.f32 1.0, %v956
  %v958 = vrcp.pop %v953
  %v959 = vmul.f32 1.0, %v958
  %v960 = vtanh.pop %v941
  %v961 = vmul.f32 %v957, %v420
  %v962 = vmul.f32 %v955, %v960
  %v963 = vadd.f32 %v961, %v962
  %v964 = vtanh.pop %v963
  %v965 = vmul.f32 %v959, %v964
  %v966 = vpack.c.bf16 %v965, %v965
  %v967 = vpack.c.bf16 %v850, %v850
  %968 = vmatprep.subr.bf16.mxu0 %v646
  %969 = vmatpush1.bf16.msra.mxu0 %v645
  %970 = vmatprep.subr.bf16.mxu0 %v642
  %971 = vmatpush1.bf16.msra.mxu0 %v641
  %972 = vmatprep.subr.bf16.mxu0 %v638
  %973 = vmatpush1.bf16.msra.mxu0 %v637
  %974 = vmatprep.subr.bf16.mxu0 %v634
  %975 = vmatpush1.bf16.msra.mxu0 %v633
  %976 = vmatprep.subr.bf16.mxu0 %v630
  %977 = vmatpush1.bf16.msra.mxu0 %v629
  %978 = vmatprep.subr.bf16.mxu0 %v626
  %979 = vmatpush1.bf16.msra.mxu0 %v625
  %980 = vmatprep.subr.bf16.mxu0 %v622
  %981 = vmatpush1.bf16.msra.mxu0 %v621
  %982 = vmatprep.subr.bf16.mxu0 %v618
  %983 = vmatpush1.bf16.msra.mxu0 %v617
  %984 = vmatprep.subr.bf16.mxu0 %v678
  %985 = vmatpush2.bf16.msra.mxu0 %v677
  %986 = vmatprep.subr.bf16.mxu0 %v674
  %987 = vmatpush2.bf16.msra.mxu0 %v673
  %988 = vmatprep.subr.bf16.mxu0 %v670
  %989 = vmatpush2.bf16.msra.mxu0 %v669
  %990 = vmatprep.subr.bf16.mxu0 %v666
  %991 = vmatpush2.bf16.msra.mxu0 %v665
  %992 = vmatprep.subr.bf16.mxu0 %v662
  %993 = vmatpush2.bf16.msra.mxu0 %v661
  %994 = vmatprep.subr.bf16.mxu0 %v658
  %995 = vmatpush2.bf16.msra.mxu0 %v657
  %996 = vmatprep.subr.bf16.mxu0 %v654
  %997 = vmatpush2.bf16.msra.mxu0 %v653
  %998 = vmatprep.subr.bf16.mxu0 %v650
  %999 = vmatpush2.bf16.msra.mxu0 %v649
  %1000 = vmatprep.mubr.bf16.mxu0 %v967
  %1001 = vmatmul.mubr.bf16.gmra.mxu0 %v966
  %v1002 = vpop.f32.mrf.mxu0
  %v1003 = vadd.f32 %v125, %v1002
  %v1004 = vpop.f32.mrf.mxu0
  %v1005 = vadd.f32 %v129, %v1004
  %v1006 = vpop.f32.mrf.mxu0
  %v1007 = vpop.f32.mrf.mxu0
  %1008 = vdwg.mxu0
  %1009 = vmatprep.subr.bf16.mxu0 %v648
  %1010 = vmatpush1.bf16.msra.mxu0 %v647
  %1011 = vmatprep.subr.bf16.mxu0 %v644
  %1012 = vmatpush1.bf16.msra.mxu0 %v643
  %1013 = vmatprep.subr.bf16.mxu0 %v640
  %1014 = vmatpush1.bf16.msra.mxu0 %v639
  %1015 = vmatprep.subr.bf16.mxu0 %v636
  %1016 = vmatpush1.bf16.msra.mxu0 %v635
  %1017 = vmatprep.subr.bf16.mxu0 %v632
  %1018 = vmatpush1.bf16.msra.mxu0 %v631
  %1019 = vmatprep.subr.bf16.mxu0 %v628
  %1020 = vmatpush1.bf16.msra.mxu0 %v627
  %1021 = vmatprep.subr.bf16.mxu0 %v624
  %1022 = vmatpush1.bf16.msra.mxu0 %v623
  %1023 = vmatprep.subr.bf16.mxu0 %v620
  %1024 = vmatpush1.bf16.msra.mxu0 %v619
  %1025 = vmatprep.subr.bf16.mxu0 %v680
  %1026 = vmatpush2.bf16.msra.mxu0 %v679
  %1027 = vmatprep.subr.bf16.mxu0 %v676
  %1028 = vmatpush2.bf16.msra.mxu0 %v675
  %1029 = vmatprep.subr.bf16.mxu0 %v672
  %1030 = vmatpush2.bf16.msra.mxu0 %v671
  %1031 = vmatprep.subr.bf16.mxu0 %v668
  %1032 = vmatpush2.bf16.msra.mxu0 %v667
  %1033 = vmatprep.subr.bf16.mxu0 %v664
  %1034 = vmatpush2.bf16.msra.mxu0 %v663
  %1035 = vmatprep.subr.bf16.mxu0 %v660
  %1036 = vmatpush2.bf16.msra.mxu0 %v659
  %1037 = vmatprep.subr.bf16.mxu0 %v656
  %1038 = vmatpush2.bf16.msra.mxu0 %v655
  %1039 = vmatprep.subr.bf16.mxu0 %v652
  %1040 = vmatpush2.bf16.msra.mxu0 %v651
  %1041 = vmatprep.mubr.bf16.mxu0 %v967
  %1042 = vmatmul.mubr.bf16.gmra.mxu0 %v966
  %v1043 = vpop.f32.mrf.mxu0
  %v1044 = vadd.f32 %v133, %v1043
  %v1045 = vpop.f32.mrf.mxu0
  %v1046 = vadd.f32 %v137, %v1045
  %v1047 = vpop.f32.mrf.mxu0
  %v1048 = vpop.f32.mrf.mxu0
  %1049 = vdwg.mxu0
  %v1050 = vxor.u32 %v1003, 2147483648
  %v1051 = vxor.u32 %v1005, 2147483648
  %v1052 = vxor.u32 %v1044, 2147483648
  %v1053 = vmul.f32 %v1050, 1.442695
  %v1054 = vpow.pop %v1053
  %v1055 = vmul.f32 %v1051, 1.442695
  %v1056 = vpow.pop %v1055
  %v1057 = vmul.f32 %v1052, 1.442695
  %v1058 = vpow.pop %v1057
  %v1059 = vadd.f32 %v1054, 1.0
  %v1060 = vadd.f32 %v1056, 1.0
  %v1061 = vadd.f32 %v1058, 1.0
  %v1062 = vrcp.pop %v1059
  %v1063 = vmul.f32 1.0, %v1062
  %v1064 = vrcp.pop %v1060
  %v1065 = vmul.f32 1.0, %v1064
  %v1066 = vrcp.pop %v1061
  %v1067 = vmul.f32 1.0, %v1066
  %v1068 = vtanh.pop %v1046
  %v1069 = vmul.f32 %v1065, %v848
  %v1070 = vmul.f32 %v1063, %v1068
  %v1071 = vadd.f32 %v1069, %v1070
  %v1072 = vtanh.pop %v1071
  %v1073 = vmul.f32 %v1067, %v1072
  %s1074 = scalar_lea.vmem %s0, 64
  %v1075 = vld [vmem:[%s1074] sm:$0xff]
  %v1076 = vld [vmem:[%s1074 + $0x8] sm:$0xff]
  %v1077 = vld [vmem:[%s1074 + $0x10] sm:$0xff]
  %v1078 = vld [vmem:[%s1074 + $0x18] sm:$0xff]
  %1079 = vmatprep.subr.bf16.mxu0 %v278
  %1080 = vmatpush1.bf16.msra.mxu0 %v277
  %1081 = vmatprep.subr.bf16.mxu0 %v274
  %1082 = vmatpush1.bf16.msra.mxu0 %v273
  %1083 = vmatprep.subr.bf16.mxu0 %v270
  %1084 = vmatpush1.bf16.msra.mxu0 %v269
  %1085 = vmatprep.subr.bf16.mxu0 %v266
  %1086 = vmatpush1.bf16.msra.mxu0 %v265
  %1087 = vmatprep.subr.bf16.mxu0 %v262
  %1088 = vmatpush1.bf16.msra.mxu0 %v261
  %1089 = vmatprep.subr.bf16.mxu0 %v258
  %1090 = vmatpush1.bf16.msra.mxu0 %v257
  %1091 = vmatprep.subr.bf16.mxu0 %v254
  %1092 = vmatpush1.bf16.msra.mxu0 %v253
  %1093 = vmatprep.subr.bf16.mxu0 %v250
  %1094 = vmatpush1.bf16.msra.mxu0 %v249
  %1095 = vmatprep.subr.bf16.mxu0 0
  %1096 = vmatpush2.bf16.msra.mxu0 0
  %1097 = vmatprep.subr.bf16.mxu0 0
  %1098 = vmatpush2.bf16.msra.mxu0 0
  %1099 = vmatprep.subr.bf16.mxu0 0
  %1100 = vmatpush2.bf16.msra.mxu0 0
  %1101 = vmatprep.subr.bf16.mxu0 0
  %1102 = vmatpush2.bf16.msra.mxu0 0
  %1103 = vmatprep.subr.bf16.mxu0 0
  %1104 = vmatpush2.bf16.msra.mxu0 0
  %1105 = vmatprep.subr.bf16.mxu0 0
  %1106 = vmatpush2.bf16.msra.mxu0 0
  %1107 = vmatprep.subr.bf16.mxu0 0
  %1108 = vmatpush2.bf16.msra.mxu0 0
  %1109 = vmatprep.subr.bf16.mxu0 0
  %1110 = vmatpush2.bf16.msra.mxu0 0
  %1111 = vmatprep.mubr.bf16.mxu0 0
  %1112 = vmatmul.mubr.bf16.gmra.mxu0 %v966
  %v1113 = vpop.f32.mrf.mxu0
  %v1114 = vadd.f32 0.0, %v1113
  %v1115 = vpop.f32.mrf.mxu0
  %v1116 = vadd.f32 0.0, %v1115
  %v1117 = vpop.f32.mrf.mxu0
  %v1118 = vpop.f32.mrf.mxu0
  %1119 = vdwg.mxu0
  %1120 = vmatprep.subr.bf16.mxu0 %v280
  %1121 = vmatpush1.bf16.msra.mxu0 %v279
  %1122 = vmatprep.subr.bf16.mxu0 %v276
  %1123 = vmatpush1.bf16.msra.mxu0 %v275
  %1124 = vmatprep.subr.bf16.mxu0 %v272
  %1125 = vmatpush1.bf16.msra.mxu0 %v271
  %1126 = vmatprep.subr.bf16.mxu0 %v268
  %1127 = vmatpush1.bf16.msra.mxu0 %v267
  %1128 = vmatprep.subr.bf16.mxu0 %v264
  %1129 = vmatpush1.bf16.msra.mxu0 %v263
  %1130 = vmatprep.subr.bf16.mxu0 %v260
  %1131 = vmatpush1.bf16.msra.mxu0 %v259
  %1132 = vmatprep.subr.bf16.mxu0 %v256
  %1133 = vmatpush1.bf16.msra.mxu0 %v255
  %1134 = vmatprep.subr.bf16.mxu0 %v252
  %1135 = vmatpush1.bf16.msra.mxu0 %v251
  %1136 = vmatprep.subr.bf16.mxu0 0
  %1137 = vmatpush2.bf16.msra.mxu0 0
  %1138 = vmatprep.subr.bf16.mxu0 0
  %1139 = vmatpush2.bf16.msra.mxu0 0
  %1140 = vmatprep.subr.bf16.mxu0 0
  %1141 = vmatpush2.bf16.msra.mxu0 0
  %1142 = vmatprep.subr.bf16.mxu0 0
  %1143 = vmatpush2.bf16.msra.mxu0 0
  %1144 = vmatprep.subr.bf16.mxu0 0
  %1145 = vmatpush2.bf16.msra.mxu0 0
  %1146 = vmatprep.subr.bf16.mxu0 0
  %1147 = vmatpush2.bf16.msra.mxu0 0
  %1148 = vmatprep.subr.bf16.mxu0 0
  %1149 = vmatpush2.bf16.msra.mxu0 0
  %1150 = vmatprep.subr.bf16.mxu0 0
  %1151 = vmatpush2.bf16.msra.mxu0 0
  %1152 = vmatprep.mubr.bf16.mxu0 0
  %1153 = vmatmul.mubr.bf16.gmra.mxu0 %v966
  %v1154 = vpop.f32.mrf.mxu0
  %v1155 = vadd.f32 0.0, %v1154
  %v1156 = vpop.f32.mrf.mxu0
  %v1157 = vadd.f32 0.0, %v1156
  %v1158 = vpop.f32.mrf.mxu0
  %v1159 = vpop.f32.mrf.mxu0
  %1160 = vdwg.mxu0
  %v1161 = vadd.f32 %v1075, %v1114
  %v1162 = vadd.f32 %v1076, %v1116
  %v1163 = vadd.f32 %v1077, %v1155
  %v1164 = vadd.f32 %v1078, %v1157
  %v1165 = vxor.u32 %v1161, 2147483648
  %v1166 = vxor.u32 %v1162, 2147483648
  %v1167 = vxor.u32 %v1163, 2147483648
  %v1168 = vmul.f32 %v1165, 1.442695
  %v1169 = vpow.pop %v1168
  %v1170 = vmul.f32 %v1166, 1.442695
  %v1171 = vpow.pop %v1170
  %v1172 = vmul.f32 %v1167, 1.442695
  %v1173 = vpow.pop %v1172
  %v1174 = vadd.f32 %v1169, 1.0
  %v1175 = vadd.f32 %v1171, 1.0
  %v1176 = vadd.f32 %v1173, 1.0
  %v1177 = vrcp.pop %v1174
  %v1178 = vmul.f32 1.0, %v1177
  %v1179 = vrcp.pop %v1175
  %v1180 = vmul.f32 1.0, %v1179
  %v1181 = vrcp.pop %v1176
  %v1182 = vmul.f32 1.0, %v1181
  %v1183 = vtanh.pop %v1164
  %v1184 = vmul.f32 %v1180, %v963
  %v1185 = vmul.f32 %v1178, %v1183
  %v1186 = vadd.f32 %v1184, %v1185
  %v1187 = vtanh.pop %v1186
  %v1188 = vmul.f32 %v1182, %v1187
  %v1189 = vpack.c.bf16 %v1188, %v1188
  %v1190 = vpack.c.bf16 %v1073, %v1073
  %1191 = vmatprep.subr.bf16.mxu0 %v646
  %1192 = vmatpush1.bf16.msra.mxu0 %v645
  %1193 = vmatprep.subr.bf16.mxu0 %v642
  %1194 = vmatpush1.bf16.msra.mxu0 %v641
  %1195 = vmatprep.subr.bf16.mxu0 %v638
  %1196 = vmatpush1.bf16.msra.mxu0 %v637
  %1197 = vmatprep.subr.bf16.mxu0 %v634
  %1198 = vmatpush1.bf16.msra.mxu0 %v633
  %1199 = vmatprep.subr.bf16.mxu0 %v630
  %1200 = vmatpush1.bf16.msra.mxu0 %v629
  %1201 = vmatprep.subr.bf16.mxu0 %v626
  %1202 = vmatpush1.bf16.msra.mxu0 %v625
  %1203 = vmatprep.subr.bf16.mxu0 %v622
  %1204 = vmatpush1.bf16.msra.mxu0 %v621
  %1205 = vmatprep.subr.bf16.mxu0 %v618
  %1206 = vmatpush1.bf16.msra.mxu0 %v617
  %1207 = vmatprep.subr.bf16.mxu0 %v678
  %1208 = vmatpush2.bf16.msra.mxu0 %v677
  %1209 = vmatprep.subr.bf16.mxu0 %v674
  %1210 = vmatpush2.bf16.msra.mxu0 %v673
  %1211 = vmatprep.subr.bf16.mxu0 %v670
  %1212 = vmatpush2.bf16.msra.mxu0 %v669
  %1213 = vmatprep.subr.bf16.mxu0 %v666
  %1214 = vmatpush2.bf16.msra.mxu0 %v665
  %1215 = vmatprep.subr.bf16.mxu0 %v662
  %1216 = vmatpush2.bf16.msra.mxu0 %v661
  %1217 = vmatprep.subr.bf16.mxu0 %v658
  %1218 = vmatpush2.bf16.msra.mxu0 %v657
  %1219 = vmatprep.subr.bf16.mxu0 %v654
  %1220 = vmatpush2.bf16.msra.mxu0 %v653
  %1221 = vmatprep.subr.bf16.mxu0 %v650
  %1222 = vmatpush2.bf16.msra.mxu0 %v649
  %1223 = vmatprep.mubr.bf16.mxu0 %v1190
  %1224 = vmatmul.mubr.bf16.gmra.mxu0 %v1189
  %v1225 = vpop.f32.mrf.mxu0
  %v1226 = vadd.f32 %v125, %v1225
  %v1227 = vpop.f32.mrf.mxu0
  %v1228 = vadd.f32 %v129, %v1227
  %v1229 = vpop.f32.mrf.mxu0
  %v1230 = vpop.f32.mrf.mxu0
  %1231 = vdwg.mxu0
  %1232 = vmatprep.subr.bf16.mxu0 %v648
  %1233 = vmatpush1.bf16.msra.mxu0 %v647
  %1234 = vmatprep.subr.bf16.mxu0 %v644
  %1235 = vmatpush1.bf16.msra.mxu0 %v643
  %1236 = vmatprep.subr.bf16.mxu0 %v640
  %1237 = vmatpush1.bf16.msra.mxu0 %v639
  %1238 = vmatprep.subr.bf16.mxu0 %v636
  %1239 = vmatpush1.bf16.msra.mxu0 %v635
  %1240 = vmatprep.subr.bf16.mxu0 %v632
  %1241 = vmatpush1.bf16.msra.mxu0 %v631
  %1242 = vmatprep.subr.bf16.mxu0 %v628
  %1243 = vmatpush1.bf16.msra.mxu0 %v627
  %1244 = vmatprep.subr.bf16.mxu0 %v624
  %1245 = vmatpush1.bf16.msra.mxu0 %v623
  %1246 = vmatprep.subr.bf16.mxu0 %v620
  %1247 = vmatpush1.bf16.msra.mxu0 %v619
  %1248 = vmatprep.subr.bf16.mxu0 %v680
  %1249 = vmatpush2.bf16.msra.mxu0 %v679
  %1250 = vmatprep.subr.bf16.mxu0 %v676
  %1251 = vmatpush2.bf16.msra.mxu0 %v675
  %1252 = vmatprep.subr.bf16.mxu0 %v672
  %1253 = vmatpush2.bf16.msra.mxu0 %v671
  %1254 = vmatprep.subr.bf16.mxu0 %v668
  %1255 = vmatpush2.bf16.msra.mxu0 %v667
  %1256 = vmatprep.subr.bf16.mxu0 %v664
  %1257 = vmatpush2.bf16.msra.mxu0 %v663
  %1258 = vmatprep.subr.bf16.mxu0 %v660
  %1259 = vmatpush2.bf16.msra.mxu0 %v659
  %1260 = vmatprep.subr.bf16.mxu0 %v656
  %1261 = vmatpush2.bf16.msra.mxu0 %v655
  %1262 = vmatprep.subr.bf16.mxu0 %v652
  %1263 = vmatpush2.bf16.msra.mxu0 %v651
  %1264 = vmatprep.mubr.bf16.mxu0 %v1190
  %1265 = vmatmul.mubr.bf16.gmra.mxu0 %v1189
  %v1266 = vpop.f32.mrf.mxu0
  %v1267 = vadd.f32 %v133, %v1266
  %v1268 = vpop.f32.mrf.mxu0
  %v1269 = vadd.f32 %v137, %v1268
  %v1270 = vpop.f32.mrf.mxu0
  %v1271 = vpop.f32.mrf.mxu0
  %1272 = vdwg.mxu0
  %v1273 = vxor.u32 %v1226, 2147483648
  %v1274 = vxor.u32 %v1228, 2147483648
  %v1275 = vxor.u32 %v1267, 2147483648
  %v1276 = vmul.f32 %v1273, 1.442695
  %v1277 = vpow.pop %v1276
  %v1278 = vmul.f32 %v1274, 1.442695
  %v1279 = vpow.pop %v1278
  %v1280 = vmul.f32 %v1275, 1.442695
  %v1281 = vpow.pop %v1280
  %v1282 = vadd.f32 %v1277, 1.0
  %v1283 = vadd.f32 %v1279, 1.0
  %v1284 = vadd.f32 %v1281, 1.0
  %v1285 = vrcp.pop %v1282
  %v1286 = vmul.f32 1.0, %v1285
  %v1287 = vrcp.pop %v1283
  %v1288 = vmul.f32 1.0, %v1287
  %v1289 = vrcp.pop %v1284
  %v1290 = vmul.f32 1.0, %v1289
  %v1291 = vtanh.pop %v1269
  %v1292 = vmul.f32 %v1288, %v1071
  %v1293 = vmul.f32 %v1286, %v1291
  %v1294 = vadd.f32 %v1292, %v1293
  %v1295 = vtanh.pop %v1294
  %v1296 = vmul.f32 %v1290, %v1295
  %s1297 = scalar_lea.vmem %s0, 96
  %v1298 = vld [vmem:[%s1297] sm:$0xff]
  %v1299 = vld [vmem:[%s1297 + $0x8] sm:$0xff]
  %v1300 = vld [vmem:[%s1297 + $0x10] sm:$0xff]
  %v1301 = vld [vmem:[%s1297 + $0x18] sm:$0xff]
  %1302 = vmatprep.subr.bf16.mxu0 %v278
  %1303 = vmatpush1.bf16.msra.mxu0 %v277
  %1304 = vmatprep.subr.bf16.mxu0 %v274
  %1305 = vmatpush1.bf16.msra.mxu0 %v273
  %1306 = vmatprep.subr.bf16.mxu0 %v270
  %1307 = vmatpush1.bf16.msra.mxu0 %v269
  %1308 = vmatprep.subr.bf16.mxu0 %v266
  %1309 = vmatpush1.bf16.msra.mxu0 %v265
  %1310 = vmatprep.subr.bf16.mxu0 %v262
  %1311 = vmatpush1.bf16.msra.mxu0 %v261
  %1312 = vmatprep.subr.bf16.mxu0 %v258
  %1313 = vmatpush1.bf16.msra.mxu0 %v257
  %1314 = vmatprep.subr.bf16.mxu0 %v254
  %1315 = vmatpush1.bf16.msra.mxu0 %v253
  %1316 = vmatprep.subr.bf16.mxu0 %v250
  %1317 = vmatpush1.bf16.msra.mxu0 %v249
  %1318 = vmatprep.subr.bf16.mxu0 0
  %1319 = vmatpush2.bf16.msra.mxu0 0
  %1320 = vmatprep.subr.bf16.mxu0 0
  %1321 = vmatpush2.bf16.msra.mxu0 0
  %1322 = vmatprep.subr.bf16.mxu0 0
  %1323 = vmatpush2.bf16.msra.mxu0 0
  %1324 = vmatprep.subr.bf16.mxu0 0
  %1325 = vmatpush2.bf16.msra.mxu0 0
  %1326 = vmatprep.subr.bf16.mxu0 0
  %1327 = vmatpush2.bf16.msra.mxu0 0
  %1328 = vmatprep.subr.bf16.mxu0 0
  %1329 = vmatpush2.bf16.msra.mxu0 0
  %1330 = vmatprep.subr.bf16.mxu0 0
  %1331 = vmatpush2.bf16.msra.mxu0 0
  %1332 = vmatprep.subr.bf16.mxu0 0
  %1333 = vmatpush2.bf16.msra.mxu0 0
  %1334 = vmatprep.mubr.bf16.mxu0 0
  %1335 = vmatmul.mubr.bf16.gmra.mxu0 %v1189
  %v1336 = vpop.f32.mrf.mxu0
  %v1337 = vadd.f32 0.0, %v1336
  %v1338 = vpop.f32.mrf.mxu0
  %v1339 = vadd.f32 0.0, %v1338
  %v1340 = vpop.f32.mrf.mxu0
  %v1341 = vpop.f32.mrf.mxu0
  %1342 = vdwg.mxu0
  %1343 = vmatprep.subr.bf16.mxu0 %v280
  %1344 = vmatpush1.bf16.msra.mxu0 %v279
  %1345 = vmatprep.subr.bf16.mxu0 %v276
  %1346 = vmatpush1.bf16.msra.mxu0 %v275
  %1347 = vmatprep.subr.bf16.mxu0 %v272
  %1348 = vmatpush1.bf16.msra.mxu0 %v271
  %1349 = vmatprep.subr.bf16.mxu0 %v268
  %1350 = vmatpush1.bf16.msra.mxu0 %v267
  %1351 = vmatprep.subr.bf16.mxu0 %v264
  %1352 = vmatpush1.bf16.msra.mxu0 %v263
  %1353 = vmatprep.subr.bf16.mxu0 %v260
  %1354 = vmatpush1.bf16.msra.mxu0 %v259
  %1355 = vmatprep.subr.bf16.mxu0 %v256
  %1356 = vmatpush1.bf16.msra.mxu0 %v255
  %1357 = vmatprep.subr.bf16.mxu0 %v252
  %1358 = vmatpush1.bf16.msra.mxu0 %v251
  %1359 = vmatprep.subr.bf16.mxu0 0
  %1360 = vmatpush2.bf16.msra.mxu0 0
  %1361 = vmatprep.subr.bf16.mxu0 0
  %1362 = vmatpush2.bf16.msra.mxu0 0
  %1363 = vmatprep.subr.bf16.mxu0 0
  %1364 = vmatpush2.bf16.msra.mxu0 0
  %1365 = vmatprep.subr.bf16.mxu0 0
  %1366 = vmatpush2.bf16.msra.mxu0 0
  %1367 = vmatprep.subr.bf16.mxu0 0
  %1368 = vmatpush2.bf16.msra.mxu0 0
  %1369 = vmatprep.subr.bf16.mxu0 0
  %1370 = vmatpush2.bf16.msra.mxu0 0
  %1371 = vmatprep.subr.bf16.mxu0 0
  %1372 = vmatpush2.bf16.msra.mxu0 0
  %1373 = vmatprep.subr.bf16.mxu0 0
  %1374 = vmatpush2.bf16.msra.mxu0 0
  %1375 = vmatprep.mubr.bf16.mxu0 0
  %1376 = vmatmul.mubr.bf16.gmra.mxu0 %v1189
  %v1377 = vpop.f32.mrf.mxu0
  %v1378 = vadd.f32 0.0, %v1377
  %v1379 = vpop.f32.mrf.mxu0
  %v1380 = vadd.f32 0.0, %v1379
  %v1381 = vpop.f32.mrf.mxu0
  %v1382 = vpop.f32.mrf.mxu0
  %1383 = vdwg.mxu0
  %v1384 = vadd.f32 %v1298, %v1337
  %v1385 = vadd.f32 %v1299, %v1339
  %v1386 = vadd.f32 %v1300, %v1378
  %v1387 = vadd.f32 %v1301, %v1380
  %v1388 = vxor.u32 %v1384, 2147483648
  %v1389 = vxor.u32 %v1385, 2147483648
  %v1390 = vxor.u32 %v1386, 2147483648
  %v1391 = vmul.f32 %v1388, 1.442695
  %v1392 = vpow.pop %v1391
  %v1393 = vmul.f32 %v1389, 1.442695
  %v1394 = vpow.pop %v1393
  %v1395 = vmul.f32 %v1390, 1.442695
  %v1396 = vpow.pop %v1395
  %v1397 = vadd.f32 %v1392, 1.0
  %v1398 = vadd.f32 %v1394, 1.0
  %v1399 = vadd.f32 %v1396, 1.0
  %v1400 = vrcp.pop %v1397
  %v1401 = vmul.f32 1.0, %v1400
  %v1402 = vrcp.pop %v1398
  %v1403 = vmul.f32 1.0, %v1402
  %v1404 = vrcp.pop %v1399
  %v1405 = vmul.f32 1.0, %v1404
  %v1406 = vtanh.pop %v1387
  %v1407 = vmul.f32 %v1403, %v1186
  %v1408 = vmul.f32 %v1401, %v1406
  %v1409 = vadd.f32 %v1407, %v1408
  %v1410 = vtanh.pop %v1409
  %v1411 = vmul.f32 %v1405, %v1410
  %v1412 = vpack.c.bf16 %v1411, %v1411
  %v1413 = vpack.c.bf16 %v1296, %v1296
  %1414 = vmatprep.subr.bf16.mxu0 %v646
  %1415 = vmatpush1.bf16.msra.mxu0 %v645
  %1416 = vmatprep.subr.bf16.mxu0 %v642
  %1417 = vmatpush1.bf16.msra.mxu0 %v641
  %1418 = vmatprep.subr.bf16.mxu0 %v638
  %1419 = vmatpush1.bf16.msra.mxu0 %v637
  %1420 = vmatprep.subr.bf16.mxu0 %v634
  %1421 = vmatpush1.bf16.msra.mxu0 %v633
  %1422 = vmatprep.subr.bf16.mxu0 %v630
  %1423 = vmatpush1.bf16.msra.mxu0 %v629
  %1424 = vmatprep.subr.bf16.mxu0 %v626
  %1425 = vmatpush1.bf16.msra.mxu0 %v625
  %1426 = vmatprep.subr.bf16.mxu0 %v622
  %1427 = vmatpush1.bf16.msra.mxu0 %v621
  %1428 = vmatprep.subr.bf16.mxu0 %v618
  %1429 = vmatpush1.bf16.msra.mxu0 %v617
  %1430 = vmatprep.subr.bf16.mxu0 %v678
  %1431 = vmatpush2.bf16.msra.mxu0 %v677
  %1432 = vmatprep.subr.bf16.mxu0 %v674
  %1433 = vmatpush2.bf16.msra.mxu0 %v673
  %1434 = vmatprep.subr.bf16.mxu0 %v670
  %1435 = vmatpush2.bf16.msra.mxu0 %v669
  %1436 = vmatprep.subr.bf16.mxu0 %v666
  %1437 = vmatpush2.bf16.msra.mxu0 %v665
  %1438 = vmatprep.subr.bf16.mxu0 %v662
  %1439 = vmatpush2.bf16.msra.mxu0 %v661
  %1440 = vmatprep.subr.bf16.mxu0 %v658
  %1441 = vmatpush2.bf16.msra.mxu0 %v657
  %1442 = vmatprep.subr.bf16.mxu0 %v654
  %1443 = vmatpush2.bf16.msra.mxu0 %v653
  %1444 = vmatprep.subr.bf16.mxu0 %v650
  %1445 = vmatpush2.bf16.msra.mxu0 %v649
  %1446 = vmatprep.mubr.bf16.mxu0 %v1413
  %1447 = vmatmul.mubr.bf16.gmra.mxu0 %v1412
  %v1448 = vpop.f32.mrf.mxu0
  %v1449 = vadd.f32 %v125, %v1448
  %v1450 = vpop.f32.mrf.mxu0
  %v1451 = vadd.f32 %v129, %v1450
  %v1452 = vpop.f32.mrf.mxu0
  %v1453 = vpop.f32.mrf.mxu0
  %1454 = vdwg.mxu0
  %1455 = vmatprep.subr.bf16.mxu0 %v648
  %1456 = vmatpush1.bf16.msra.mxu0 %v647
  %1457 = vmatprep.subr.bf16.mxu0 %v644
  %1458 = vmatpush1.bf16.msra.mxu0 %v643
  %1459 = vmatprep.subr.bf16.mxu0 %v640
  %1460 = vmatpush1.bf16.msra.mxu0 %v639
  %1461 = vmatprep.subr.bf16.mxu0 %v636
  %1462 = vmatpush1.bf16.msra.mxu0 %v635
  %1463 = vmatprep.subr.bf16.mxu0 %v632
  %1464 = vmatpush1.bf16.msra.mxu0 %v631
  %1465 = vmatprep.subr.bf16.mxu0 %v628
  %1466 = vmatpush1.bf16.msra.mxu0 %v627
  %1467 = vmatprep.subr.bf16.mxu0 %v624
  %1468 = vmatpush1.bf16.msra.mxu0 %v623
  %1469 = vmatprep.subr.bf16.mxu0 %v620
  %1470 = vmatpush1.bf16.msra.mxu0 %v619
  %1471 = vmatprep.subr.bf16.mxu0 %v680
  %1472 = vmatpush2.bf16.msra.mxu0 %v679
  %1473 = vmatprep.subr.bf16.mxu0 %v676
  %1474 = vmatpush2.bf16.msra.mxu0 %v675
  %1475 = vmatprep.subr.bf16.mxu0 %v672
  %1476 = vmatpush2.bf16.msra.mxu0 %v671
  %1477 = vmatprep.subr.bf16.mxu0 %v668
  %1478 = vmatpush2.bf16.msra.mxu0 %v667
  %1479 = vmatprep.subr.bf16.mxu0 %v664
  %1480 = vmatpush2.bf16.msra.mxu0 %v663
  %1481 = vmatprep.subr.bf16.mxu0 %v660
  %1482 = vmatpush2.bf16.msra.mxu0 %v659
  %1483 = vmatprep.subr.bf16.mxu0 %v656
  %1484 = vmatpush2.bf16.msra.mxu0 %v655
  %1485 = vmatprep.subr.bf16.mxu0 %v652
  %1486 = vmatpush2.bf16.msra.mxu0 %v651
  %1487 = vmatprep.mubr.bf16.mxu0 %v1413
  %1488 = vmatmul.mubr.bf16.gmra.mxu0 %v1412
  %v1489 = vpop.f32.mrf.mxu0
  %v1490 = vadd.f32 %v133, %v1489
  %v1491 = vpop.f32.mrf.mxu0
  %v1492 = vadd.f32 %v137, %v1491
  %v1493 = vpop.f32.mrf.mxu0
  %v1494 = vpop.f32.mrf.mxu0
  %1495 = vdwg.mxu0
  %v1496 = vxor.u32 %v1449, 2147483648
  %v1497 = vxor.u32 %v1451, 2147483648
  %v1498 = vxor.u32 %v1490, 2147483648
  %v1499 = vmul.f32 %v1496, 1.442695
  %v1500 = vpow.pop %v1499
  %v1501 = vmul.f32 %v1497, 1.442695
  %v1502 = vpow.pop %v1501
  %v1503 = vmul.f32 %v1498, 1.442695
  %v1504 = vpow.pop %v1503
  %v1505 = vadd.f32 %v1500, 1.0
  %v1506 = vadd.f32 %v1502, 1.0
  %v1507 = vadd.f32 %v1504, 1.0
  %v1508 = vrcp.pop %v1505
  %v1509 = vmul.f32 1.0, %v1508
  %v1510 = vrcp.pop %v1506
  %v1511 = vmul.f32 1.0, %v1510
  %v1512 = vrcp.pop %v1507
  %v1513 = vmul.f32 1.0, %v1512
  %v1514 = vtanh.pop %v1492
  %v1515 = vmul.f32 %v1511, %v1294
  %v1516 = vmul.f32 %v1509, %v1514
  %v1517 = vadd.f32 %v1515, %v1516
  %v1518 = vtanh.pop %v1517
  %v1519 = vmul.f32 %v1513, %v1518
  %s1520 = scalar_lea.vmem %s0, 128
  %v1521 = vld [vmem:[%s1520] sm:$0xff]
  %v1522 = vld [vmem:[%s1520 + $0x8] sm:$0xff]
  %v1523 = vld [vmem:[%s1520 + $0x10] sm:$0xff]
  %v1524 = vld [vmem:[%s1520 + $0x18] sm:$0xff]
  %1525 = vmatprep.subr.bf16.mxu0 %v278
  %1526 = vmatpush1.bf16.msra.mxu0 %v277
  %1527 = vmatprep.subr.bf16.mxu0 %v274
  %1528 = vmatpush1.bf16.msra.mxu0 %v273
  %1529 = vmatprep.subr.bf16.mxu0 %v270
  %1530 = vmatpush1.bf16.msra.mxu0 %v269
  %1531 = vmatprep.subr.bf16.mxu0 %v266
  %1532 = vmatpush1.bf16.msra.mxu0 %v265
  %1533 = vmatprep.subr.bf16.mxu0 %v262
  %1534 = vmatpush1.bf16.msra.mxu0 %v261
  %1535 = vmatprep.subr.bf16.mxu0 %v258
  %1536 = vmatpush1.bf16.msra.mxu0 %v257
  %1537 = vmatprep.subr.bf16.mxu0 %v254
  %1538 = vmatpush1.bf16.msra.mxu0 %v253
  %1539 = vmatprep.subr.bf16.mxu0 %v250
  %1540 = vmatpush1.bf16.msra.mxu0 %v249
  %1541 = vmatprep.subr.bf16.mxu0 0
  %1542 = vmatpush2.bf16.msra.mxu0 0
  %1543 = vmatprep.subr.bf16.mxu0 0
  %1544 = vmatpush2.bf16.msra.mxu0 0
  %1545 = vmatprep.subr.bf16.mxu0 0
  %1546 = vmatpush2.bf16.msra.mxu0 0
  %1547 = vmatprep.subr.bf16.mxu0 0
  %1548 = vmatpush2.bf16.msra.mxu0 0
  %1549 = vmatprep.subr.bf16.mxu0 0
  %1550 = vmatpush2.bf16.msra.mxu0 0
  %1551 = vmatprep.subr.bf16.mxu0 0
  %1552 = vmatpush2.bf16.msra.mxu0 0
  %1553 = vmatprep.subr.bf16.mxu0 0
  %1554 = vmatpush2.bf16.msra.mxu0 0
  %1555 = vmatprep.subr.bf16.mxu0 0
  %1556 = vmatpush2.bf16.msra.mxu0 0
  %1557 = vmatprep.mubr.bf16.mxu0 0
  %1558 = vmatmul.mubr.bf16.gmra.mxu0 %v1412
  %v1559 = vpop.f32.mrf.mxu0
  %v1560 = vadd.f32 0.0, %v1559
  %v1561 = vpop.f32.mrf.mxu0
  %v1562 = vadd.f32 0.0, %v1561
  %v1563 = vpop.f32.mrf.mxu0
  %v1564 = vpop.f32.mrf.mxu0
  %1565 = vdwg.mxu0
  %1566 = vmatprep.subr.bf16.mxu0 %v280
  %1567 = vmatpush1.bf16.msra.mxu0 %v279
  %1568 = vmatprep.subr.bf16.mxu0 %v276
  %1569 = vmatpush1.bf16.msra.mxu0 %v275
  %1570 = vmatprep.subr.bf16.mxu0 %v272
  %1571 = vmatpush1.bf16.msra.mxu0 %v271
  %1572 = vmatprep.subr.bf16.mxu0 %v268
  %1573 = vmatpush1.bf16.msra.mxu0 %v267
  %1574 = vmatprep.subr.bf16.mxu0 %v264
  %1575 = vmatpush1.bf16.msra.mxu0 %v263
  %1576 = vmatprep.subr.bf16.mxu0 %v260
  %1577 = vmatpush1.bf16.msra.mxu0 %v259
  %1578 = vmatprep.subr.bf16.mxu0 %v256
  %1579 = vmatpush1.bf16.msra.mxu0 %v255
  %1580 = vmatprep.subr.bf16.mxu0 %v252
  %1581 = vmatpush1.bf16.msra.mxu0 %v251
  %1582 = vmatprep.subr.bf16.mxu0 0
  %1583 = vmatpush2.bf16.msra.mxu0 0
  %1584 = vmatprep.subr.bf16.mxu0 0
  %1585 = vmatpush2.bf16.msra.mxu0 0
  %1586 = vmatprep.subr.bf16.mxu0 0
  %1587 = vmatpush2.bf16.msra.mxu0 0
  %1588 = vmatprep.subr.bf16.mxu0 0
  %1589 = vmatpush2.bf16.msra.mxu0 0
  %1590 = vmatprep.subr.bf16.mxu0 0
  %1591 = vmatpush2.bf16.msra.mxu0 0
  %1592 = vmatprep.subr.bf16.mxu0 0
  %1593 = vmatpush2.bf16.msra.mxu0 0
  %1594 = vmatprep.subr.bf16.mxu0 0
  %1595 = vmatpush2.bf16.msra.mxu0 0
  %1596 = vmatprep.subr.bf16.mxu0 0
  %1597 = vmatpush2.bf16.msra.mxu0 0
  %1598 = vmatprep.mubr.bf16.mxu0 0
  %1599 = vmatmul.mubr.bf16.gmra.mxu0 %v1412
  %v1600 = vpop.f32.mrf.mxu0
  %v1601 = vadd.f32 0.0, %v1600
  %v1602 = vpop.f32.mrf.mxu0
  %v1603 = vadd.f32 0.0, %v1602
  %v1604 = vpop.f32.mrf.mxu0
  %v1605 = vpop.f32.mrf.mxu0
  %1606 = vdwg.mxu0
  %v1607 = vadd.f32 %v1521, %v1560
  %v1608 = vadd.f32 %v1522, %v1562
  %v1609 = vadd.f32 %v1523, %v1601
  %v1610 = vadd.f32 %v1524, %v1603
  %v1611 = vxor.u32 %v1607, 2147483648
  %v1612 = vxor.u32 %v1608, 2147483648
  %v1613 = vxor.u32 %v1609, 2147483648
  %v1614 = vmul.f32 %v1611, 1.442695
  %v1615 = vpow.pop %v1614
  %v1616 = vmul.f32 %v1612, 1.442695
  %v1617 = vpow.pop %v1616
  %v1618 = vmul.f32 %v1613, 1.442695
  %v1619 = vpow.pop %v1618
  %v1620 = vadd.f32 %v1615, 1.0
  %v1621 = vadd.f32 %v1617, 1.0
  %v1622 = vadd.f32 %v1619, 1.0
  %v1623 = vrcp.pop %v1620
  %v1624 = vmul.f32 1.0, %v1623
  %v1625 = vrcp.pop %v1621
  %v1626 = vmul.f32 1.0, %v1625
  %v1627 = vrcp.pop %v1622
  %v1628 = vmul.f32 1.0, %v1627
  %v1629 = vtanh.pop %v1610
  %v1630 = vmul.f32 %v1626, %v1409
  %v1631 = vmul.f32 %v1624, %v1629
  %v1632 = vadd.f32 %v1630, %v1631
  %v1633 = vtanh.pop %v1632
  %v1634 = vmul.f32 %v1628, %v1633
  %v1635 = vpack.c.bf16 %v1634, %v1634
  %v1636 = vpack.c.bf16 %v1519, %v1519
  %1637 = vmatprep.subr.bf16.mxu0 %v646
  %1638 = vmatpush1.bf16.msra.mxu0 %v645
  %1639 = vmatprep.subr.bf16.mxu0 %v642
  %1640 = vmatpush1.bf16.msra.mxu0 %v641
  %1641 = vmatprep.subr.bf16.mxu0 %v638
  %1642 = vmatpush1.bf16.msra.mxu0 %v637
  %1643 = vmatprep.subr.bf16.mxu0 %v634
  %1644 = vmatpush1.bf16.msra.mxu0 %v633
  %1645 = vmatprep.subr.bf16.mxu0 %v630
  %1646 = vmatpush1.bf16.msra.mxu0 %v629
  %1647 = vmatprep.subr.bf16.mxu0 %v626
  %1648 = vmatpush1.bf16.msra.mxu0 %v625
  %1649 = vmatprep.subr.bf16.mxu0 %v622
  %1650 = vmatpush1.bf16.msra.mxu0 %v621
  %1651 = vmatprep.subr.bf16.mxu0 %v618
  %1652 = vmatpush1.bf16.msra.mxu0 %v617
  %1653 = vmatprep.subr.bf16.mxu0 %v678
  %1654 = vmatpush2.bf16.msra.mxu0 %v677
  %1655 = vmatprep.subr.bf16.mxu0 %v674
  %1656 = vmatpush2.bf16.msra.mxu0 %v673
  %1657 = vmatprep.subr.bf16.mxu0 %v670
  %1658 = vmatpush2.bf16.msra.mxu0 %v669
  %1659 = vmatprep.subr.bf16.mxu0 %v666
  %1660 = vmatpush2.bf16.msra.mxu0 %v665
  %1661 = vmatprep.subr.bf16.mxu0 %v662
  %1662 = vmatpush2.bf16.msra.mxu0 %v661
  %1663 = vmatprep.subr.bf16.mxu0 %v658
  %1664 = vmatpush2.bf16.msra.mxu0 %v657
  %1665 = vmatprep.subr.bf16.mxu0 %v654
  %1666 = vmatpush2.bf16.msra.mxu0 %v653
  %1667 = vmatprep.subr.bf16.mxu0 %v650
  %1668 = vmatpush2.bf16.msra.mxu0 %v649
  %1669 = vmatprep.mubr.bf16.mxu0 %v1636
  %1670 = vmatmul.mubr.bf16.gmra.mxu0 %v1635
  %v1671 = vpop.f32.mrf.mxu0
  %v1672 = vadd.f32 %v125, %v1671
  %v1673 = vpop.f32.mrf.mxu0
  %v1674 = vadd.f32 %v129, %v1673
  %v1675 = vpop.f32.mrf.mxu0
  %v1676 = vpop.f32.mrf.mxu0
  %1677 = vdwg.mxu0
  %1678 = vmatprep.subr.bf16.mxu0 %v648
  %1679 = vmatpush1.bf16.msra.mxu0 %v647
  %1680 = vmatprep.subr.bf16.mxu0 %v644
  %1681 = vmatpush1.bf16.msra.mxu0 %v643
  %1682 = vmatprep.subr.bf16.mxu0 %v640
  %1683 = vmatpush1.bf16.msra.mxu0 %v639
  %1684 = vmatprep.subr.bf16.mxu0 %v636
  %1685 = vmatpush1.bf16.msra.mxu0 %v635
  %1686 = vmatprep.subr.bf16.mxu0 %v632
  %1687 = vmatpush1.bf16.msra.mxu0 %v631
  %1688 = vmatprep.subr.bf16.mxu0 %v628
  %1689 = vmatpush1.bf16.msra.mxu0 %v627
  %1690 = vmatprep.subr.bf16.mxu0 %v624
  %1691 = vmatpush1.bf16.msra.mxu0 %v623
  %1692 = vmatprep.subr.bf16.mxu0 %v620
  %1693 = vmatpush1.bf16.msra.mxu0 %v619
  %1694 = vmatprep.subr.bf16.mxu0 %v680
  %1695 = vmatpush2.bf16.msra.mxu0 %v679
  %1696 = vmatprep.subr.bf16.mxu0 %v676
  %1697 = vmatpush2.bf16.msra.mxu0 %v675
  %1698 = vmatprep.subr.bf16.mxu0 %v672
  %1699 = vmatpush2.bf16.msra.mxu0 %v671
  %1700 = vmatprep.subr.bf16.mxu0 %v668
  %1701 = vmatpush2.bf16.msra.mxu0 %v667
  %1702 = vmatprep.subr.bf16.mxu0 %v664
  %1703 = vmatpush2.bf16.msra.mxu0 %v663
  %1704 = vmatprep.subr.bf16.mxu0 %v660
  %1705 = vmatpush2.bf16.msra.mxu0 %v659
  %1706 = vmatprep.subr.bf16.mxu0 %v656
  %1707 = vmatpush2.bf16.msra.mxu0 %v655
  %1708 = vmatprep.subr.bf16.mxu0 %v652
  %1709 = vmatpush2.bf16.msra.mxu0 %v651
  %1710 = vmatprep.mubr.bf16.mxu0 %v1636
  %1711 = vmatmul.mubr.bf16.gmra.mxu0 %v1635
  %v1712 = vpop.f32.mrf.mxu0
  %v1713 = vadd.f32 %v133, %v1712
  %v1714 = vpop.f32.mrf.mxu0
  %v1715 = vadd.f32 %v137, %v1714
  %v1716 = vpop.f32.mrf.mxu0
  %v1717 = vpop.f32.mrf.mxu0
  %1718 = vdwg.mxu0
  %v1719 = vxor.u32 %v1672, 2147483648
  %v1720 = vxor.u32 %v1674, 2147483648
  %v1721 = vxor.u32 %v1713, 2147483648
  %v1722 = vmul.f32 %v1719, 1.442695
  %v1723 = vpow.pop %v1722
  %v1724 = vmul.f32 %v1720, 1.442695
  %v1725 = vpow.pop %v1724
  %v1726 = vmul.f32 %v1721, 1.442695
  %v1727 = vpow.pop %v1726
  %v1728 = vadd.f32 %v1723, 1.0
  %v1729 = vadd.f32 %v1725, 1.0
  %v1730 = vadd.f32 %v1727, 1.0
  %v1731 = vrcp.pop %v1728
  %v1732 = vmul.f32 1.0, %v1731
  %v1733 = vrcp.pop %v1729
  %v1734 = vmul.f32 1.0, %v1733
  %v1735 = vrcp.pop %v1730
  %v1736 = vmul.f32 1.0, %v1735
  %v1737 = vtanh.pop %v1715
  %v1738 = vmul.f32 %v1734, %v1517
  %v1739 = vmul.f32 %v1732, %v1737
  %v1740 = vadd.f32 %v1738, %v1739
  %v1741 = vtanh.pop %v1740
  %v1742 = vmul.f32 %v1736, %v1741
  %s1743 = scalar_lea.vmem %s0, 160
  %v1744 = vld [vmem:[%s1743] sm:$0xff]
  %v1745 = vld [vmem:[%s1743 + $0x8] sm:$0xff]
  %v1746 = vld [vmem:[%s1743 + $0x10] sm:$0xff]
  %v1747 = vld [vmem:[%s1743 + $0x18] sm:$0xff]
  %1748 = vmatprep.subr.bf16.mxu0 %v278
  %1749 = vmatpush1.bf16.msra.mxu0 %v277
  %1750 = vmatprep.subr.bf16.mxu0 %v274
  %1751 = vmatpush1.bf16.msra.mxu0 %v273
  %1752 = vmatprep.subr.bf16.mxu0 %v270
  %1753 = vmatpush1.bf16.msra.mxu0 %v269
  %1754 = vmatprep.subr.bf16.mxu0 %v266
  %1755 = vmatpush1.bf16.msra.mxu0 %v265
  %1756 = vmatprep.subr.bf16.mxu0 %v262
  %1757 = vmatpush1.bf16.msra.mxu0 %v261
  %1758 = vmatprep.subr.bf16.mxu0 %v258
  %1759 = vmatpush1.bf16.msra.mxu0 %v257
  %1760 = vmatprep.subr.bf16.mxu0 %v254
  %1761 = vmatpush1.bf16.msra.mxu0 %v253
  %1762 = vmatprep.subr.bf16.mxu0 %v250
  %1763 = vmatpush1.bf16.msra.mxu0 %v249
  %1764 = vmatprep.subr.bf16.mxu0 0
  %1765 = vmatpush2.bf16.msra.mxu0 0
  %1766 = vmatprep.subr.bf16.mxu0 0
  %1767 = vmatpush2.bf16.msra.mxu0 0
  %1768 = vmatprep.subr.bf16.mxu0 0
  %1769 = vmatpush2.bf16.msra.mxu0 0
  %1770 = vmatprep.subr.bf16.mxu0 0
  %1771 = vmatpush2.bf16.msra.mxu0 0
  %1772 = vmatprep.subr.bf16.mxu0 0
  %1773 = vmatpush2.bf16.msra.mxu0 0
  %1774 = vmatprep.subr.bf16.mxu0 0
  %1775 = vmatpush2.bf16.msra.mxu0 0
  %1776 = vmatprep.subr.bf16.mxu0 0
  %1777 = vmatpush2.bf16.msra.mxu0 0
  %1778 = vmatprep.subr.bf16.mxu0 0
  %1779 = vmatpush2.bf16.msra.mxu0 0
  %1780 = vmatprep.mubr.bf16.mxu0 0
  %1781 = vmatmul.mubr.bf16.gmra.mxu0 %v1635
  %v1782 = vpop.f32.mrf.mxu0
  %v1783 = vadd.f32 0.0, %v1782
  %v1784 = vpop.f32.mrf.mxu0
  %v1785 = vadd.f32 0.0, %v1784
  %v1786 = vpop.f32.mrf.mxu0
  %v1787 = vpop.f32.mrf.mxu0
  %1788 = vdwg.mxu0
  %1789 = vmatprep.subr.bf16.mxu0 %v280
  %1790 = vmatpush1.bf16.msra.mxu0 %v279
  %1791 = vmatprep.subr.bf16.mxu0 %v276
  %1792 = vmatpush1.bf16.msra.mxu0 %v275
  %1793 = vmatprep.subr.bf16.mxu0 %v272
  %1794 = vmatpush1.bf16.msra.mxu0 %v271
  %1795 = vmatprep.subr.bf16.mxu0 %v268
  %1796 = vmatpush1.bf16.msra.mxu0 %v267
  %1797 = vmatprep.subr.bf16.mxu0 %v264
  %1798 = vmatpush1.bf16.msra.mxu0 %v263
  %1799 = vmatprep.subr.bf16.mxu0 %v260
  %1800 = vmatpush1.bf16.msra.mxu0 %v259
  %1801 = vmatprep.subr.bf16.mxu0 %v256
  %1802 = vmatpush1.bf16.msra.mxu0 %v255
  %1803 = vmatprep.subr.bf16.mxu0 %v252
  %1804 = vmatpush1.bf16.msra.mxu0 %v251
  %1805 = vmatprep.subr.bf16.mxu0 0
  %1806 = vmatpush2.bf16.msra.mxu0 0
  %1807 = vmatprep.subr.bf16.mxu0 0
  %1808 = vmatpush2.bf16.msra.mxu0 0
  %1809 = vmatprep.subr.bf16.mxu0 0
  %1810 = vmatpush2.bf16.msra.mxu0 0
  %1811 = vmatprep.subr.bf16.mxu0 0
  %1812 = vmatpush2.bf16.msra.mxu0 0
  %1813 = vmatprep.subr.bf16.mxu0 0
  %1814 = vmatpush2.bf16.msra.mxu0 0
  %1815 = vmatprep.subr.bf16.mxu0 0
  %1816 = vmatpush2.bf16.msra.mxu0 0
  %1817 = vmatprep.subr.bf16.mxu0 0
  %1818 = vmatpush2.bf16.msra.mxu0 0
  %1819 = vmatprep.subr.bf16.mxu0 0
  %1820 = vmatpush2.bf16.msra.mxu0 0
  %1821 = vmatprep.mubr.bf16.mxu0 0
  %1822 = vmatmul.mubr.bf16.gmra.mxu0 %v1635
  %v1823 = vpop.f32.mrf.mxu0
  %v1824 = vadd.f32 0.0, %v1823
  %v1825 = vpop.f32.mrf.mxu0
  %v1826 = vadd.f32 0.0, %v1825
  %v1827 = vpop.f32.mrf.mxu0
  %v1828 = vpop.f32.mrf.mxu0
  %1829 = vdwg.mxu0
  %v1830 = vadd.f32 %v1744, %v1783
  %v1831 = vadd.f32 %v1745, %v1785
  %v1832 = vadd.f32 %v1746, %v1824
  %v1833 = vadd.f32 %v1747, %v1826
  %v1834 = vxor.u32 %v1830, 2147483648
  %v1835 = vxor.u32 %v1831, 2147483648
  %v1836 = vxor.u32 %v1832, 2147483648
  %v1837 = vmul.f32 %v1834, 1.442695
  %v1838 = vpow.pop %v1837
  %v1839 = vmul.f32 %v1835, 1.442695
  %v1840 = vpow.pop %v1839
  %v1841 = vmul.f32 %v1836, 1.442695
  %v1842 = vpow.pop %v1841
  %v1843 = vadd.f32 %v1838, 1.0
  %v1844 = vadd.f32 %v1840, 1.0
  %v1845 = vadd.f32 %v1842, 1.0
  %v1846 = vrcp.pop %v1843
  %v1847 = vmul.f32 1.0, %v1846
  %v1848 = vrcp.pop %v1844
  %v1849 = vmul.f32 1.0, %v1848
  %v1850 = vrcp.pop %v1845
  %v1851 = vmul.f32 1.0, %v1850
  %v1852 = vtanh.pop %v1833
  %v1853 = vmul.f32 %v1849, %v1632
  %v1854 = vmul.f32 %v1847, %v1852
  %v1855 = vadd.f32 %v1853, %v1854
  %v1856 = vtanh.pop %v1855
  %v1857 = vmul.f32 %v1851, %v1856
  %v1858 = vpack.c.bf16 %v1857, %v1857
  %v1859 = vpack.c.bf16 %v1742, %v1742
  %1860 = vmatprep.subr.bf16.mxu0 %v646
  %1861 = vmatpush1.bf16.msra.mxu0 %v645
  %1862 = vmatprep.subr.bf16.mxu0 %v642
  %1863 = vmatpush1.bf16.msra.mxu0 %v641
  %1864 = vmatprep.subr.bf16.mxu0 %v638
  %1865 = vmatpush1.bf16.msra.mxu0 %v637
  %1866 = vmatprep.subr.bf16.mxu0 %v634
  %1867 = vmatpush1.bf16.msra.mxu0 %v633
  %1868 = vmatprep.subr.bf16.mxu0 %v630
  %1869 = vmatpush1.bf16.msra.mxu0 %v629
  %1870 = vmatprep.subr.bf16.mxu0 %v626
  %1871 = vmatpush1.bf16.msra.mxu0 %v625
  %1872 = vmatprep.subr.bf16.mxu0 %v622
  %1873 = vmatpush1.bf16.msra.mxu0 %v621
  %1874 = vmatprep.subr.bf16.mxu0 %v618
  %1875 = vmatpush1.bf16.msra.mxu0 %v617
  %1876 = vmatprep.subr.bf16.mxu0 %v678
  %1877 = vmatpush2.bf16.msra.mxu0 %v677
  %1878 = vmatprep.subr.bf16.mxu0 %v674
  %1879 = vmatpush2.bf16.msra.mxu0 %v673
  %1880 = vmatprep.subr.bf16.mxu0 %v670
  %1881 = vmatpush2.bf16.msra.mxu0 %v669
  %1882 = vmatprep.subr.bf16.mxu0 %v666
  %1883 = vmatpush2.bf16.msra.mxu0 %v665
  %1884 = vmatprep.subr.bf16.mxu0 %v662
  %1885 = vmatpush2.bf16.msra.mxu0 %v661
  %1886 = vmatprep.subr.bf16.mxu0 %v658
  %1887 = vmatpush2.bf16.msra.mxu0 %v657
  %1888 = vmatprep.subr.bf16.mxu0 %v654
  %1889 = vmatpush2.bf16.msra.mxu0 %v653
  %1890 = vmatprep.subr.bf16.mxu0 %v650
  %1891 = vmatpush2.bf16.msra.mxu0 %v649
  %1892 = vmatprep.mubr.bf16.mxu0 %v1859
  %1893 = vmatmul.mubr.bf16.gmra.mxu0 %v1858
  %v1894 = vpop.f32.mrf.mxu0
  %v1895 = vadd.f32 %v125, %v1894
  %v1896 = vpop.f32.mrf.mxu0
  %v1897 = vadd.f32 %v129, %v1896
  %v1898 = vpop.f32.mrf.mxu0
  %v1899 = vpop.f32.mrf.mxu0
  %1900 = vdwg.mxu0
  %1901 = vmatprep.subr.bf16.mxu0 %v648
  %1902 = vmatpush1.bf16.msra.mxu0 %v647
  %1903 = vmatprep.subr.bf16.mxu0 %v644
  %1904 = vmatpush1.bf16.msra.mxu0 %v643
  %1905 = vmatprep.subr.bf16.mxu0 %v640
  %1906 = vmatpush1.bf16.msra.mxu0 %v639
  %1907 = vmatprep.subr.bf16.mxu0 %v636
  %1908 = vmatpush1.bf16.msra.mxu0 %v635
  %1909 = vmatprep.subr.bf16.mxu0 %v632
  %1910 = vmatpush1.bf16.msra.mxu0 %v631
  %1911 = vmatprep.subr.bf16.mxu0 %v628
  %1912 = vmatpush1.bf16.msra.mxu0 %v627
  %1913 = vmatprep.subr.bf16.mxu0 %v624
  %1914 = vmatpush1.bf16.msra.mxu0 %v623
  %1915 = vmatprep.subr.bf16.mxu0 %v620
  %1916 = vmatpush1.bf16.msra.mxu0 %v619
  %1917 = vmatprep.subr.bf16.mxu0 %v680
  %1918 = vmatpush2.bf16.msra.mxu0 %v679
  %1919 = vmatprep.subr.bf16.mxu0 %v676
  %1920 = vmatpush2.bf16.msra.mxu0 %v675
  %1921 = vmatprep.subr.bf16.mxu0 %v672
  %1922 = vmatpush2.bf16.msra.mxu0 %v671
  %1923 = vmatprep.subr.bf16.mxu0 %v668
  %1924 = vmatpush2.bf16.msra.mxu0 %v667
  %1925 = vmatprep.subr.bf16.mxu0 %v664
  %1926 = vmatpush2.bf16.msra.mxu0 %v663
  %1927 = vmatprep.subr.bf16.mxu0 %v660
  %1928 = vmatpush2.bf16.msra.mxu0 %v659
  %1929 = vmatprep.subr.bf16.mxu0 %v656
  %1930 = vmatpush2.bf16.msra.mxu0 %v655
  %1931 = vmatprep.subr.bf16.mxu0 %v652
  %1932 = vmatpush2.bf16.msra.mxu0 %v651
  %1933 = vmatprep.mubr.bf16.mxu0 %v1859
  %1934 = vmatmul.mubr.bf16.gmra.mxu0 %v1858
  %v1935 = vpop.f32.mrf.mxu0
  %v1936 = vadd.f32 %v133, %v1935
  %v1937 = vpop.f32.mrf.mxu0
  %v1938 = vadd.f32 %v137, %v1937
  %v1939 = vpop.f32.mrf.mxu0
  %v1940 = vpop.f32.mrf.mxu0
  %1941 = vdwg.mxu0
  %v1942 = vxor.u32 %v1895, 2147483648
  %v1943 = vxor.u32 %v1897, 2147483648
  %v1944 = vxor.u32 %v1936, 2147483648
  %v1945 = vmul.f32 %v1942, 1.442695
  %v1946 = vpow.pop %v1945
  %v1947 = vmul.f32 %v1943, 1.442695
  %v1948 = vpow.pop %v1947
  %v1949 = vmul.f32 %v1944, 1.442695
  %v1950 = vpow.pop %v1949
  %v1951 = vadd.f32 %v1946, 1.0
  %v1952 = vadd.f32 %v1948, 1.0
  %v1953 = vadd.f32 %v1950, 1.0
  %v1954 = vrcp.pop %v1951
  %v1955 = vmul.f32 1.0, %v1954
  %v1956 = vrcp.pop %v1952
  %v1957 = vmul.f32 1.0, %v1956
  %v1958 = vrcp.pop %v1953
  %v1959 = vmul.f32 1.0, %v1958
  %v1960 = vtanh.pop %v1938
  %v1961 = vmul.f32 %v1957, %v1740
  %v1962 = vmul.f32 %v1955, %v1960
  %v1963 = vadd.f32 %v1961, %v1962
  %v1964 = vtanh.pop %v1963
  %v1965 = vmul.f32 %v1959, %v1964
  %s1966 = scalar_lea.vmem %s0, 192
  %v1967 = vld [vmem:[%s1966] sm:$0xff]
  %v1968 = vld [vmem:[%s1966 + $0x8] sm:$0xff]
  %v1969 = vld [vmem:[%s1966 + $0x10] sm:$0xff]
  %v1970 = vld [vmem:[%s1966 + $0x18] sm:$0xff]
  %1971 = vmatprep.subr.bf16.mxu0 %v278
  %1972 = vmatpush1.bf16.msra.mxu0 %v277
  %1973 = vmatprep.subr.bf16.mxu0 %v274
  %1974 = vmatpush1.bf16.msra.mxu0 %v273
  %1975 = vmatprep.subr.bf16.mxu0 %v270
  %1976 = vmatpush1.bf16.msra.mxu0 %v269
  %1977 = vmatprep.subr.bf16.mxu0 %v266
  %1978 = vmatpush1.bf16.msra.mxu0 %v265
  %1979 = vmatprep.subr.bf16.mxu0 %v262
  %1980 = vmatpush1.bf16.msra.mxu0 %v261
  %1981 = vmatprep.subr.bf16.mxu0 %v258
  %1982 = vmatpush1.bf16.msra.mxu0 %v257
  %1983 = vmatprep.subr.bf16.mxu0 %v254
  %1984 = vmatpush1.bf16.msra.mxu0 %v253
  %1985 = vmatprep.subr.bf16.mxu0 %v250
  %1986 = vmatpush1.bf16.msra.mxu0 %v249
  %1987 = vmatprep.subr.bf16.mxu0 0
  %1988 = vmatpush2.bf16.msra.mxu0 0
  %1989 = vmatprep.subr.bf16.mxu0 0
  %1990 = vmatpush2.bf16.msra.mxu0 0
  %1991 = vmatprep.subr.bf16.mxu0 0
  %1992 = vmatpush2.bf16.msra.mxu0 0
  %1993 = vmatprep.subr.bf16.mxu0 0
  %1994 = vmatpush2.bf16.msra.mxu0 0
  %1995 = vmatprep.subr.bf16.mxu0 0
  %1996 = vmatpush2.bf16.msra.mxu0 0
  %1997 = vmatprep.subr.bf16.mxu0 0
  %1998 = vmatpush2.bf16.msra.mxu0 0
  %1999 = vmatprep.subr.bf16.mxu0 0
  %2000 = vmatpush2.bf16.msra.mxu0 0
  %2001 = vmatprep.subr.bf16.mxu0 0
  %2002 = vmatpush2.bf16.msra.mxu0 0
  %2003 = vmatprep.mubr.bf16.mxu0 0
  %2004 = vmatmul.mubr.bf16.gmra.mxu0 %v1858
  %v2005 = vpop.f32.mrf.mxu0
  %v2006 = vadd.f32 0.0, %v2005
  %v2007 = vpop.f32.mrf.mxu0
  %v2008 = vadd.f32 0.0, %v2007
  %v2009 = vpop.f32.mrf.mxu0
  %v2010 = vpop.f32.mrf.mxu0
  %2011 = vdwg.mxu0
  %2012 = vmatprep.subr.bf16.mxu0 %v280
  %2013 = vmatpush1.bf16.msra.mxu0 %v279
  %2014 = vmatprep.subr.bf16.mxu0 %v276
  %2015 = vmatpush1.bf16.msra.mxu0 %v275
  %2016 = vmatprep.subr.bf16.mxu0 %v272
  %2017 = vmatpush1.bf16.msra.mxu0 %v271
  %2018 = vmatprep.subr.bf16.mxu0 %v268
  %2019 = vmatpush1.bf16.msra.mxu0 %v267
  %2020 = vmatprep.subr.bf16.mxu0 %v264
  %2021 = vmatpush1.bf16.msra.mxu0 %v263
  %2022 = vmatprep.subr.bf16.mxu0 %v260
  %2023 = vmatpush1.bf16.msra.mxu0 %v259
  %2024 = vmatprep.subr.bf16.mxu0 %v256
  %2025 = vmatpush1.bf16.msra.mxu0 %v255
  %2026 = vmatprep.subr.bf16.mxu0 %v252
  %2027 = vmatpush1.bf16.msra.mxu0 %v251
  %2028 = vmatprep.subr.bf16.mxu0 0
  %2029 = vmatpush2.bf16.msra.mxu0 0
  %2030 = vmatprep.subr.bf16.mxu0 0
  %2031 = vmatpush2.bf16.msra.mxu0 0
  %2032 = vmatprep.subr.bf16.mxu0 0
  %2033 = vmatpush2.bf16.msra.mxu0 0
  %2034 = vmatprep.subr.bf16.mxu0 0
  %2035 = vmatpush2.bf16.msra.mxu0 0
  %2036 = vmatprep.subr.bf16.mxu0 0
  %2037 = vmatpush2.bf16.msra.mxu0 0
  %2038 = vmatprep.subr.bf16.mxu0 0
  %2039 = vmatpush2.bf16.msra.mxu0 0
  %2040 = vmatprep.subr.bf16.mxu0 0
  %2041 = vmatpush2.bf16.msra.mxu0 0
  %2042 = vmatprep.subr.bf16.mxu0 0
  %2043 = vmatpush2.bf16.msra.mxu0 0
  %2044 = vmatprep.mubr.bf16.mxu0 0
  %2045 = vmatmul.mubr.bf16.gmra.mxu0 %v1858
  %v2046 = vpop.f32.mrf.mxu0
  %v2047 = vadd.f32 0.0, %v2046
  %v2048 = vpop.f32.mrf.mxu0
  %v2049 = vadd.f32 0.0, %v2048
  %v2050 = vpop.f32.mrf.mxu0
  %v2051 = vpop.f32.mrf.mxu0
  %2052 = vdwg.mxu0
  %v2053 = vadd.f32 %v1967, %v2006
  %v2054 = vadd.f32 %v1968, %v2008
  %v2055 = vadd.f32 %v1969, %v2047
  %v2056 = vadd.f32 %v1970, %v2049
  %v2057 = vxor.u32 %v2053, 2147483648
  %v2058 = vxor.u32 %v2054, 2147483648
  %v2059 = vxor.u32 %v2055, 2147483648
  %v2060 = vmul.f32 %v2057, 1.442695
  %v2061 = vpow.pop %v2060
  %v2062 = vmul.f32 %v2058, 1.442695
  %v2063 = vpow.pop %v2062
  %v2064 = vmul.f32 %v2059, 1.442695
  %v2065 = vpow.pop %v2064
  %v2066 = vadd.f32 %v2061, 1.0
  %v2067 = vadd.f32 %v2063, 1.0
  %v2068 = vadd.f32 %v2065, 1.0
  %v2069 = vrcp.pop %v2066
  %v2070 = vmul.f32 1.0, %v2069
  %v2071 = vrcp.pop %v2067
  %v2072 = vmul.f32 1.0, %v2071
  %v2073 = vrcp.pop %v2068
  %v2074 = vmul.f32 1.0, %v2073
  %v2075 = vtanh.pop %v2056
  %v2076 = vmul.f32 %v2072, %v1855
  %v2077 = vmul.f32 %v2070, %v2075
  %v2078 = vadd.f32 %v2076, %v2077
  %v2079 = vtanh.pop %v2078
  %v2080 = vmul.f32 %v2074, %v2079
  %v2081 = vpack.c.bf16 %v2080, %v2080
  %v2082 = vpack.c.bf16 %v1965, %v1965
  %2083 = vmatprep.subr.bf16.mxu0 %v646
  %2084 = vmatpush1.bf16.msra.mxu0 %v645
  %2085 = vmatprep.subr.bf16.mxu0 %v642
  %2086 = vmatpush1.bf16.msra.mxu0 %v641
  %2087 = vmatprep.subr.bf16.mxu0 %v638
  %2088 = vmatpush1.bf16.msra.mxu0 %v637
  %2089 = vmatprep.subr.bf16.mxu0 %v634
  %2090 = vmatpush1.bf16.msra.mxu0 %v633
  %2091 = vmatprep.subr.bf16.mxu0 %v630
  %2092 = vmatpush1.bf16.msra.mxu0 %v629
  %2093 = vmatprep.subr.bf16.mxu0 %v626
  %2094 = vmatpush1.bf16.msra.mxu0 %v625
  %2095 = vmatprep.subr.bf16.mxu0 %v622
  %2096 = vmatpush1.bf16.msra.mxu0 %v621
  %2097 = vmatprep.subr.bf16.mxu0 %v618
  %2098 = vmatpush1.bf16.msra.mxu0 %v617
  %2099 = vmatprep.subr.bf16.mxu0 %v678
  %2100 = vmatpush2.bf16.msra.mxu0 %v677
  %2101 = vmatprep.subr.bf16.mxu0 %v674
  %2102 = vmatpush2.bf16.msra.mxu0 %v673
  %2103 = vmatprep.subr.bf16.mxu0 %v670
  %2104 = vmatpush2.bf16.msra.mxu0 %v669
  %2105 = vmatprep.subr.bf16.mxu0 %v666
  %2106 = vmatpush2.bf16.msra.mxu0 %v665
  %2107 = vmatprep.subr.bf16.mxu0 %v662
  %2108 = vmatpush2.bf16.msra.mxu0 %v661
  %2109 = vmatprep.subr.bf16.mxu0 %v658
  %2110 = vmatpush2.bf16.msra.mxu0 %v657
  %2111 = vmatprep.subr.bf16.mxu0 %v654
  %2112 = vmatpush2.bf16.msra.mxu0 %v653
  %2113 = vmatprep.subr.bf16.mxu0 %v650
  %2114 = vmatpush2.bf16.msra.mxu0 %v649
  %2115 = vmatprep.mubr.bf16.mxu0 %v2082
  %2116 = vmatmul.mubr.bf16.gmra.mxu0 %v2081
  %v2117 = vpop.f32.mrf.mxu0
  %v2118 = vadd.f32 %v125, %v2117
  %v2119 = vpop.f32.mrf.mxu0
  %v2120 = vadd.f32 %v129, %v2119
  %v2121 = vpop.f32.mrf.mxu0
  %v2122 = vpop.f32.mrf.mxu0
  %2123 = vdwg.mxu0
  %2124 = vmatprep.subr.bf16.mxu0 %v648
  %2125 = vmatpush1.bf16.msra.mxu0 %v647
  %2126 = vmatprep.subr.bf16.mxu0 %v644
  %2127 = vmatpush1.bf16.msra.mxu0 %v643
  %2128 = vmatprep.subr.bf16.mxu0 %v640
  %2129 = vmatpush1.bf16.msra.mxu0 %v639
  %2130 = vmatprep.subr.bf16.mxu0 %v636
  %2131 = vmatpush1.bf16.msra.mxu0 %v635
  %2132 = vmatprep.subr.bf16.mxu0 %v632
  %2133 = vmatpush1.bf16.msra.mxu0 %v631
  %2134 = vmatprep.subr.bf16.mxu0 %v628
  %2135 = vmatpush1.bf16.msra.mxu0 %v627
  %2136 = vmatprep.subr.bf16.mxu0 %v624
  %2137 = vmatpush1.bf16.msra.mxu0 %v623
  %2138 = vmatprep.subr.bf16.mxu0 %v620
  %2139 = vmatpush1.bf16.msra.mxu0 %v619
  %2140 = vmatprep.subr.bf16.mxu0 %v680
  %2141 = vmatpush2.bf16.msra.mxu0 %v679
  %2142 = vmatprep.subr.bf16.mxu0 %v676
  %2143 = vmatpush2.bf16.msra.mxu0 %v675
  %2144 = vmatprep.subr.bf16.mxu0 %v672
  %2145 = vmatpush2.bf16.msra.mxu0 %v671
  %2146 = vmatprep.subr.bf16.mxu0 %v668
  %2147 = vmatpush2.bf16.msra.mxu0 %v667
  %2148 = vmatprep.subr.bf16.mxu0 %v664
  %2149 = vmatpush2.bf16.msra.mxu0 %v663
  %2150 = vmatprep.subr.bf16.mxu0 %v660
  %2151 = vmatpush2.bf16.msra.mxu0 %v659
  %2152 = vmatprep.subr.bf16.mxu0 %v656
  %2153 = vmatpush2.bf16.msra.mxu0 %v655
  %2154 = vmatprep.subr.bf16.mxu0 %v652
  %2155 = vmatpush2.bf16.msra.mxu0 %v651
  %2156 = vmatprep.mubr.bf16.mxu0 %v2082
  %2157 = vmatmul.mubr.bf16.gmra.mxu0 %v2081
  %v2158 = vpop.f32.mrf.mxu0
  %v2159 = vadd.f32 %v133, %v2158
  %v2160 = vpop.f32.mrf.mxu0
  %v2161 = vadd.f32 %v137, %v2160
  %v2162 = vpop.f32.mrf.mxu0
  %v2163 = vpop.f32.mrf.mxu0
  %2164 = vdwg.mxu0
  %v2165 = vxor.u32 %v2118, 2147483648
  %v2166 = vxor.u32 %v2120, 2147483648
  %v2167 = vxor.u32 %v2159, 2147483648
  %v2168 = vmul.f32 %v2165, 1.442695
  %v2169 = vpow.pop %v2168
  %v2170 = vmul.f32 %v2166, 1.442695
  %v2171 = vpow.pop %v2170
  %v2172 = vmul.f32 %v2167, 1.442695
  %v2173 = vpow.pop %v2172
  %v2174 = vadd.f32 %v2169, 1.0
  %v2175 = vadd.f32 %v2171, 1.0
  %v2176 = vadd.f32 %v2173, 1.0
  %v2177 = vrcp.pop %v2174
  %v2178 = vmul.f32 1.0, %v2177
  %v2179 = vrcp.pop %v2175
  %v2180 = vmul.f32 1.0, %v2179
  %v2181 = vrcp.pop %v2176
  %v2182 = vmul.f32 1.0, %v2181
  %v2183 = vtanh.pop %v2161
  %v2184 = vmul.f32 %v2180, %v1963
  %v2185 = vmul.f32 %v2178, %v2183
  %v2186 = vadd.f32 %v2184, %v2185
  %v2187 = vtanh.pop %v2186
  %v2188 = vmul.f32 %v2182, %v2187
  %s2189 = scalar_lea.vmem %s0, 224
  %v2190 = vld [vmem:[%s2189] sm:$0xff]
  %v2191 = vld [vmem:[%s2189 + $0x8] sm:$0xff]
  %v2192 = vld [vmem:[%s2189 + $0x10] sm:$0xff]
  %v2193 = vld [vmem:[%s2189 + $0x18] sm:$0xff]
  %2194 = vmatprep.subr.bf16.mxu0 %v278
  %2195 = vmatpush1.bf16.msra.mxu0 %v277
  %2196 = vmatprep.subr.bf16.mxu0 %v274
  %2197 = vmatpush1.bf16.msra.mxu0 %v273
  %2198 = vmatprep.subr.bf16.mxu0 %v270
  %2199 = vmatpush1.bf16.msra.mxu0 %v269
  %2200 = vmatprep.subr.bf16.mxu0 %v266
  %2201 = vmatpush1.bf16.msra.mxu0 %v265
  %2202 = vmatprep.subr.bf16.mxu0 %v262
  %2203 = vmatpush1.bf16.msra.mxu0 %v261
  %2204 = vmatprep.subr.bf16.mxu0 %v258
  %2205 = vmatpush1.bf16.msra.mxu0 %v257
  %2206 = vmatprep.subr.bf16.mxu0 %v254
  %2207 = vmatpush1.bf16.msra.mxu0 %v253
  %2208 = vmatprep.subr.bf16.mxu0 %v250
  %2209 = vmatpush1.bf16.msra.mxu0 %v249
  %2210 = vmatprep.subr.bf16.mxu0 0
  %2211 = vmatpush2.bf16.msra.mxu0 0
  %2212 = vmatprep.subr.bf16.mxu0 0
  %2213 = vmatpush2.bf16.msra.mxu0 0
  %2214 = vmatprep.subr.bf16.mxu0 0
  %2215 = vmatpush2.bf16.msra.mxu0 0
  %2216 = vmatprep.subr.bf16.mxu0 0
  %2217 = vmatpush2.bf16.msra.mxu0 0
  %2218 = vmatprep.subr.bf16.mxu0 0
  %2219 = vmatpush2.bf16.msra.mxu0 0
  %2220 = vmatprep.subr.bf16.mxu0 0
  %2221 = vmatpush2.bf16.msra.mxu0 0
  %2222 = vmatprep.subr.bf16.mxu0 0
  %2223 = vmatpush2.bf16.msra.mxu0 0
  %2224 = vmatprep.subr.bf16.mxu0 0
  %2225 = vmatpush2.bf16.msra.mxu0 0
  %2226 = vmatprep.mubr.bf16.mxu0 0
  %2227 = vmatmul.mubr.bf16.gmra.mxu0 %v2081
  %v2228 = vpop.f32.mrf.mxu0
  %v2229 = vadd.f32 0.0, %v2228
  %v2230 = vpop.f32.mrf.mxu0
  %v2231 = vadd.f32 0.0, %v2230
  %v2232 = vpop.f32.mrf.mxu0
  %v2233 = vpop.f32.mrf.mxu0
  %2234 = vdwg.mxu0
  %2235 = vmatprep.subr.bf16.mxu0 %v280
  %2236 = vmatpush1.bf16.msra.mxu0 %v279
  %2237 = vmatprep.subr.bf16.mxu0 %v276
  %2238 = vmatpush1.bf16.msra.mxu0 %v275
  %2239 = vmatprep.subr.bf16.mxu0 %v272
  %2240 = vmatpush1.bf16.msra.mxu0 %v271
  %2241 = vmatprep.subr.bf16.mxu0 %v268
  %2242 = vmatpush1.bf16.msra.mxu0 %v267
  %2243 = vmatprep.subr.bf16.mxu0 %v264
  %2244 = vmatpush1.bf16.msra.mxu0 %v263
  %2245 = vmatprep.subr.bf16.mxu0 %v260
  %2246 = vmatpush1.bf16.msra.mxu0 %v259
  %2247 = vmatprep.subr.bf16.mxu0 %v256
  %2248 = vmatpush1.bf16.msra.mxu0 %v255
  %2249 = vmatprep.subr.bf16.mxu0 %v252
  %2250 = vmatpush1.bf16.msra.mxu0 %v251
  %2251 = vmatprep.subr.bf16.mxu0 0
  %2252 = vmatpush2.bf16.msra.mxu0 0
  %2253 = vmatprep.subr.bf16.mxu0 0
  %2254 = vmatpush2.bf16.msra.mxu0 0
  %2255 = vmatprep.subr.bf16.mxu0 0
  %2256 = vmatpush2.bf16.msra.mxu0 0
  %2257 = vmatprep.subr.bf16.mxu0 0
  %2258 = vmatpush2.bf16.msra.mxu0 0
  %2259 = vmatprep.subr.bf16.mxu0 0
  %2260 = vmatpush2.bf16.msra.mxu0 0
  %2261 = vmatprep.subr.bf16.mxu0 0
  %2262 = vmatpush2.bf16.msra.mxu0 0
  %2263 = vmatprep.subr.bf16.mxu0 0
  %2264 = vmatpush2.bf16.msra.mxu0 0
  %2265 = vmatprep.subr.bf16.mxu0 0
  %2266 = vmatpush2.bf16.msra.mxu0 0
  %2267 = vmatprep.mubr.bf16.mxu0 0
  %2268 = vmatmul.mubr.bf16.gmra.mxu0 %v2081
  %v2269 = vpop.f32.mrf.mxu0
  %v2270 = vadd.f32 0.0, %v2269
  %v2271 = vpop.f32.mrf.mxu0
  %v2272 = vadd.f32 0.0, %v2271
  %v2273 = vpop.f32.mrf.mxu0
  %v2274 = vpop.f32.mrf.mxu0
  %2275 = vdwg.mxu0
  %v2276 = vadd.f32 %v2190, %v2229
  %v2277 = vadd.f32 %v2191, %v2231
  %v2278 = vadd.f32 %v2192, %v2270
  %v2279 = vadd.f32 %v2193, %v2272
  %v2280 = vxor.u32 %v2276, 2147483648
  %v2281 = vxor.u32 %v2277, 2147483648
  %v2282 = vxor.u32 %v2278, 2147483648
  %v2283 = vmul.f32 %v2280, 1.442695
  %v2284 = vpow.pop %v2283
  %v2285 = vmul.f32 %v2281, 1.442695
  %v2286 = vpow.pop %v2285
  %v2287 = vmul.f32 %v2282, 1.442695
  %v2288 = vpow.pop %v2287
  %v2289 = vadd.f32 %v2284, 1.0
  %v2290 = vadd.f32 %v2286, 1.0
  %v2291 = vadd.f32 %v2288, 1.0
  %v2292 = vrcp.pop %v2289
  %v2293 = vmul.f32 1.0, %v2292
  %v2294 = vrcp.pop %v2290
  %v2295 = vmul.f32 1.0, %v2294
  %v2296 = vrcp.pop %v2291
  %v2297 = vmul.f32 1.0, %v2296
  %v2298 = vtanh.pop %v2279
  %v2299 = vmul.f32 %v2295, %v2078
  %v2300 = vmul.f32 %v2293, %v2298
  %v2301 = vadd.f32 %v2299, %v2300
  %v2302 = vtanh.pop %v2301
  %v2303 = vmul.f32 %v2297, %v2302
  %v2304 = vpack.c.bf16 %v2303, %v2303
  %v2305 = vpack.c.bf16 %v2188, %v2188
  %2306 = vmatprep.subr.bf16.mxu0 %v646
  %2307 = vmatpush1.bf16.msra.mxu0 %v645
  %2308 = vmatprep.subr.bf16.mxu0 %v642
  %2309 = vmatpush1.bf16.msra.mxu0 %v641
  %2310 = vmatprep.subr.bf16.mxu0 %v638
  %2311 = vmatpush1.bf16.msra.mxu0 %v637
  %2312 = vmatprep.subr.bf16.mxu0 %v634
  %2313 = vmatpush1.bf16.msra.mxu0 %v633
  %2314 = vmatprep.subr.bf16.mxu0 %v630
  %2315 = vmatpush1.bf16.msra.mxu0 %v629
  %2316 = vmatprep.subr.bf16.mxu0 %v626
  %2317 = vmatpush1.bf16.msra.mxu0 %v625
  %2318 = vmatprep.subr.bf16.mxu0 %v622
  %2319 = vmatpush1.bf16.msra.mxu0 %v621
  %2320 = vmatprep.subr.bf16.mxu0 %v618
  %2321 = vmatpush1.bf16.msra.mxu0 %v617
  %2322 = vmatprep.subr.bf16.mxu0 %v678
  %2323 = vmatpush2.bf16.msra.mxu0 %v677
  %2324 = vmatprep.subr.bf16.mxu0 %v674
  %2325 = vmatpush2.bf16.msra.mxu0 %v673
  %2326 = vmatprep.subr.bf16.mxu0 %v670
  %2327 = vmatpush2.bf16.msra.mxu0 %v669
  %2328 = vmatprep.subr.bf16.mxu0 %v666
  %2329 = vmatpush2.bf16.msra.mxu0 %v665
  %2330 = vmatprep.subr.bf16.mxu0 %v662
  %2331 = vmatpush2.bf16.msra.mxu0 %v661
  %2332 = vmatprep.subr.bf16.mxu0 %v658
  %2333 = vmatpush2.bf16.msra.mxu0 %v657
  %2334 = vmatprep.subr.bf16.mxu0 %v654
  %2335 = vmatpush2.bf16.msra.mxu0 %v653
  %2336 = vmatprep.subr.bf16.mxu0 %v650
  %2337 = vmatpush2.bf16.msra.mxu0 %v649
  %2338 = vmatprep.mubr.bf16.mxu0 %v2305
  %2339 = vmatmul.mubr.bf16.gmra.mxu0 %v2304
  %v2340 = vpop.f32.mrf.mxu0
  %v2341 = vadd.f32 %v125, %v2340
  %v2342 = vpop.f32.mrf.mxu0
  %v2343 = vadd.f32 %v129, %v2342
  %v2344 = vpop.f32.mrf.mxu0
  %v2345 = vpop.f32.mrf.mxu0
  %2346 = vdwg.mxu0
  %2347 = vmatprep.subr.bf16.mxu0 %v648
  %2348 = vmatpush1.bf16.msra.mxu0 %v647
  %2349 = vmatprep.subr.bf16.mxu0 %v644
  %2350 = vmatpush1.bf16.msra.mxu0 %v643
  %2351 = vmatprep.subr.bf16.mxu0 %v640
  %2352 = vmatpush1.bf16.msra.mxu0 %v639
  %2353 = vmatprep.subr.bf16.mxu0 %v636
  %2354 = vmatpush1.bf16.msra.mxu0 %v635
  %2355 = vmatprep.subr.bf16.mxu0 %v632
  %2356 = vmatpush1.bf16.msra.mxu0 %v631
  %2357 = vmatprep.subr.bf16.mxu0 %v628
  %2358 = vmatpush1.bf16.msra.mxu0 %v627
  %2359 = vmatprep.subr.bf16.mxu0 %v624
  %2360 = vmatpush1.bf16.msra.mxu0 %v623
  %2361 = vmatprep.subr.bf16.mxu0 %v620
  %2362 = vmatpush1.bf16.msra.mxu0 %v619
  %2363 = vmatprep.subr.bf16.mxu0 %v680
  %2364 = vmatpush2.bf16.msra.mxu0 %v679
  %2365 = vmatprep.subr.bf16.mxu0 %v676
  %2366 = vmatpush2.bf16.msra.mxu0 %v675
  %2367 = vmatprep.subr.bf16.mxu0 %v672
  %2368 = vmatpush2.bf16.msra.mxu0 %v671
  %2369 = vmatprep.subr.bf16.mxu0 %v668
  %2370 = vmatpush2.bf16.msra.mxu0 %v667
  %2371 = vmatprep.subr.bf16.mxu0 %v664
  %2372 = vmatpush2.bf16.msra.mxu0 %v663
  %2373 = vmatprep.subr.bf16.mxu0 %v660
  %2374 = vmatpush2.bf16.msra.mxu0 %v659
  %2375 = vmatprep.subr.bf16.mxu0 %v656
  %2376 = vmatpush2.bf16.msra.mxu0 %v655
  %2377 = vmatprep.subr.bf16.mxu0 %v652
  %2378 = vmatpush2.bf16.msra.mxu0 %v651
  %2379 = vmatprep.mubr.bf16.mxu0 %v2305
  %2380 = vmatmul.mubr.bf16.gmra.mxu0 %v2304
  %v2381 = vpop.f32.mrf.mxu0
  %v2382 = vadd.f32 %v133, %v2381
  %v2383 = vpop.f32.mrf.mxu0
  %v2384 = vadd.f32 %v137, %v2383
  %v2385 = vpop.f32.mrf.mxu0
  %v2386 = vpop.f32.mrf.mxu0
  %2387 = vdwg.mxu0
  %v2388 = vxor.u32 %v2341, 2147483648
  %v2389 = vxor.u32 %v2343, 2147483648
  %v2390 = vxor.u32 %v2382, 2147483648
  %v2391 = vmul.f32 %v2388, 1.442695
  %v2392 = vpow.pop %v2391
  %v2393 = vmul.f32 %v2389, 1.442695
  %v2394 = vpow.pop %v2393
  %v2395 = vmul.f32 %v2390, 1.442695
  %v2396 = vpow.pop %v2395
  %v2397 = vadd.f32 %v2392, 1.0
  %v2398 = vadd.f32 %v2394, 1.0
  %v2399 = vadd.f32 %v2396, 1.0
  %v2400 = vrcp.pop %v2397
  %v2401 = vmul.f32 1.0, %v2400
  %v2402 = vrcp.pop %v2398
  %v2403 = vmul.f32 1.0, %v2402
  %v2404 = vrcp.pop %v2399
  %v2405 = vmul.f32 1.0, %v2404
  %v2406 = vtanh.pop %v2384
  %v2407 = vmul.f32 %v2403, %v2186
  %v2408 = vmul.f32 %v2401, %v2406
  %v2409 = vadd.f32 %v2407, %v2408
  %v2410 = vtanh.pop %v2409
  %v2411 = vmul.f32 %v2405, %v2410
  %v2412 = vld [vmem:[%s4] sm:$0xff]
  %v2413 = vld [vmem:[%s4 + $0x8] sm:$0xff]
  %v2414 = vld [vmem:[%s4 + $0x10] sm:$0xff]
  %v2415 = vld [vmem:[%s4 + $0x18] sm:$0xff]
  %v2416 = vld [vmem:[%s4 + $0x20] sm:$0xff]
  %v2417 = vld [vmem:[%s4 + $0x28] sm:$0xff]
  %v2418 = vld [vmem:[%s4 + $0x30] sm:$0xff]
  %v2419 = vld [vmem:[%s4 + $0x38] sm:$0xff]
  %v2420 = vld [vmem:[%s4 + $0x40] sm:$0xff]
  %v2421 = vld [vmem:[%s4 + $0x48] sm:$0xff]
  %v2422 = vld [vmem:[%s4 + $0x50] sm:$0xff]
  %v2423 = vld [vmem:[%s4 + $0x58] sm:$0xff]
  %v2424 = vld [vmem:[%s4 + $0x60] sm:$0xff]
  %v2425 = vld [vmem:[%s4 + $0x68] sm:$0xff]
  %v2426 = vld [vmem:[%s4 + $0x70] sm:$0xff]
  %v2427 = vld [vmem:[%s4 + $0x78] sm:$0xff]
  %2428 = vmatprep.subr.mxu0 0.0
  %2429 = vmatpush1.msra.mxu0 %v2427
  %2430 = vmatprep.subr.mxu0 0.0
  %2431 = vmatpush1.msra.mxu0 %v2426
  %2432 = vmatprep.subr.mxu0 0.0
  %2433 = vmatpush1.msra.mxu0 %v2425
  %2434 = vmatprep.subr.mxu0 0.0
  %2435 = vmatpush1.msra.mxu0 %v2424
  %2436 = vmatprep.subr.mxu0 0.0
  %2437 = vmatpush1.msra.mxu0 %v2423
  %2438 = vmatprep.subr.mxu0 0.0
  %2439 = vmatpush1.msra.mxu0 %v2422
  %2440 = vmatprep.subr.mxu0 0.0
  %2441 = vmatpush1.msra.mxu0 %v2421
  %2442 = vmatprep.subr.mxu0 0.0
  %2443 = vmatpush1.msra.mxu0 %v2420
  %2444 = vmatprep.subr.mxu0 0.0
  %2445 = vmatpush1.msra.mxu0 %v2419
  %2446 = vmatprep.subr.mxu0 0.0
  %2447 = vmatpush1.msra.mxu0 %v2418
  %2448 = vmatprep.subr.mxu0 0.0
  %2449 = vmatpush1.msra.mxu0 %v2417
  %2450 = vmatprep.subr.mxu0 0.0
  %2451 = vmatpush1.msra.mxu0 %v2416
  %2452 = vmatprep.subr.mxu0 0.0
  %2453 = vmatpush1.msra.mxu0 %v2415
  %2454 = vmatprep.subr.mxu0 0.0
  %2455 = vmatpush1.msra.mxu0 %v2414
  %2456 = vmatprep.subr.mxu0 0.0
  %2457 = vmatpush1.msra.mxu0 %v2413
  %2458 = vmatprep.subr.mxu0 0.0
  %2459 = vmatpush1.msra.mxu0 %v2412
  %2460 = vmatprep.subr.mxu0 0.0
  %2461 = vmatpush2.msra.mxu0 0.0
  %2462 = vmatprep.subr.mxu0 0.0
  %2463 = vmatpush2.msra.mxu0 0.0
  %2464 = vmatprep.subr.mxu0 0.0
  %2465 = vmatpush2.msra.mxu0 0.0
  %2466 = vmatprep.subr.mxu0 0.0
  %2467 = vmatpush2.msra.mxu0 0.0
  %2468 = vmatprep.subr.mxu0 0.0
  %2469 = vmatpush2.msra.mxu0 0.0
  %2470 = vmatprep.subr.mxu0 0.0
  %2471 = vmatpush2.msra.mxu0 0.0
  %2472 = vmatprep.subr.mxu0 0.0
  %2473 = vmatpush2.msra.mxu0 0.0
  %2474 = vmatprep.subr.mxu0 0.0
  %2475 = vmatpush2.msra.mxu0 0.0
  %2476 = vmatprep.subr.mxu0 0.0
  %2477 = vmatpush2.msra.mxu0 0.0
  %2478 = vmatprep.subr.mxu0 0.0
  %2479 = vmatpush2.msra.mxu0 0.0
  %2480 = vmatprep.subr.mxu0 0.0
  %2481 = vmatpush2.msra.mxu0 0.0
  %2482 = vmatprep.subr.mxu0 0.0
  %2483 = vmatpush2.msra.mxu0 0.0
  %2484 = vmatprep.subr.mxu0 0.0
  %2485 = vmatpush2.msra.mxu0 0.0
  %2486 = vmatprep.subr.mxu0 0.0
  %2487 = vmatpush2.msra.mxu0 0.0
  %2488 = vmatprep.subr.mxu0 0.0
  %2489 = vmatpush2.msra.mxu0 0.0
  %2490 = vmatprep.subr.mxu0 0.0
  %2491 = vmatpush2.msra.mxu0 0.0
  %2492 = vmatprep.mubr.f32.mxu0 0.0
  %2493 = vmatmul.mubr.f32.gmra.mxu0 %v2411
  %v2494 = vpop.f32.mrf.mxu0
  %v2495 = vadd.f32 %v147, %v2494
  %v2496 = vpop.f32.mrf.mxu0
  %2497 = vdwg.mxu0
  %vm2498 = vcmask 31744
  %v2499 = vsel %vm2498, %v2495, -inf
  %2500 = vmax.xlane.f32.xlu0 %v2499
  %v2501 = vpop.xlane.xlu0 %2500
  %v2502 = vsub.f32 %v2495, %v2501
  %v2503 = vmul.f32 %v2502, 1.442695
  %v2504 = vpow.pop %v2503
  %v2505 = vsel %vm2498, %v2504, 0.0
  %2506 = vadd.xlane.f32.xlu0 %v2505
  %v2507 = vpop.xlane.xlu0 %2506
  %v2508 = vrcp.pop %v2507
  %v2509 = vmul.f32 %v2504, %v2508
  %2510 = vst.msk [vmem:[%s6] sm:$0xff] %vm2498, %v2509
  // Predicated region
  $region26: #{policy_network_forward.1} parent=0 // pred_check
    _
  $region27: #{policy_network_forward.1} parent=0 // pred_check_branch
    %2512 = sbr.rel (0) target = $region29
  $region28: #{policy_network_forward.1} parent=0 // pred_region
    _
  $region29: #{policy_network_forward.1} parent=0 // pred_fallthru
    _
  // Predicated region
  $region30: #{policy_network_forward.1} parent=0 // pred_check
    _
  $region31: #{policy_network_forward.1} parent=0 // pred_check_branch
    %2514 = sbr.rel (0) target = $region33
  $region32: #{policy_network_forward.1} parent=0 // pred_region
    _
  $region33: #{policy_network_forward.1} parent=0 // pred_fallthru
    _

</llo_original>
